<compile_context>
chip_gen: v7x
topology: tpu7x:2x2x1
jax: 0.10.0
libtpu: 0.0.40
codegen_flags: <defaults>
</compile_context>

<pallas_src>
from typing import NamedTuple

import numpy as np
import jax
import jax.numpy as jnp
from jax.experimental import pallas as pl
from jax.experimental.pallas import tpu as pltpu


def _round_up(x: int, m: int) -> int:
    return (x + m - 1) // m * m


# --------------------------------------------------------------------------------------
# Host-side (init-time) precompute: Double-Sphere fisheye grids + sampling operator.
# Mirrors Cube2Fisheye.get_points_on_sphere / generate_grid (numpy instead of torch).
# --------------------------------------------------------------------------------------

_CUBE_ROTATIONS = (  # Back, Down, Front, Left, Right, Up -- same order as the torch module
    np.array([[-1, 0, 0], [0, 1, 0], [0, 0, -1]], dtype=np.float32),
    np.array([[1, 0, 0], [0, 0, 1], [0, -1, 0]], dtype=np.float32),
    np.array([[1, 0, 0], [0, 1, 0], [0, 0, 1]], dtype=np.float32),
    np.array([[0, 0, -1], [0, 1, 0], [1, 0, 0]], dtype=np.float32),
    np.array([[0, 0, 1], [0, 1, 0], [-1, 0, 0]], dtype=np.float32),
    np.array([[1, 0, 0], [0, 0, -1], [0, 1, 0]], dtype=np.float32),
)


def _points_on_sphere(fish_h, fish_w, fish_fov, cx, cy, fx, fy, xi, alpha):
    fov_rad = fish_fov / 180.0 * np.pi
    fov_cos = np.cos(fov_rad / 2.0)
    v, u = np.meshgrid(np.arange(fish_h, dtype=np.float32),
                       np.arange(fish_w, dtype=np.float32), indexing="ij")
    mx = (u - cx) / fx
    my = (v - cy) / fy
    r2 = mx * mx + my * my
    with np.errstate(invalid="ignore", divide="ignore"):
        mz = (1.0 - alpha * alpha * r2) / (
            alpha * np.sqrt(1.0 - (2.0 * alpha - 1.0) * r2) + 1.0 - alpha)
        mz2 = mz * mz
        k1 = mz * xi + np.sqrt(mz2 + (1.0 - xi * xi) * r2)
        k2 = mz2 + r2
        k = k1 / k2
    pts = k[..., None] * np.stack([mx, my, mz], axis=-1)
    pts[..., 2] -= xi
    pts[..., 0] *= -1.0
    pts[..., 1] *= -1.0
    with np.errstate(invalid="ignore"):
        fov_mask = pts[..., 2] >= fov_cos             # dot(ray, [0, 0, 1]) >= cos(fov/2)
        if alpha > 0.5:
            # NOTE: matches the reference module verbatim: r2 <= 1 - (2*alpha - 1)
            fov_mask &= r2 <= (1.0 - (2.0 * alpha - 1.0))
    return pts.astype(np.float32), fov_mask


def _generate_grids(fish_h, fish_w, fish_fov, cx, cy, fx, fy, xi, alpha):
    pts, fov_mask = _points_on_sphere(fish_h, fish_w, fish_fov, cx, cy, fx, fy, xi, alpha)
    not_assigned = np.ones((fish_h, fish_w), dtype=bool)
    grids = []
    for rot in _CUBE_ROTATIONS:
        rotated = (pts.reshape(-1, 3) @ rot.T).reshape(fish_h, fish_w, 3)
        with np.errstate(divide="ignore", invalid="ignore"):
            grid = rotated / np.abs(rotated[..., 2:3])
        with np.errstate(invalid="ignore"):
            mask = np.abs(grid).max(axis=-1) <= 1.0
            mask &= grid[..., 2] == 1.0
        mask &= fov_mask
        mask &= not_assigned
        grid = grid.copy()
        grid[~mask] = 2.0                             # outside [-1, 1] -> samples zeros
        not_assigned &= ~mask
        grids.append(-grid[..., :2])                  # grid_sample (x, y) convention
    return np.stack(grids, axis=0).astype(np.float32)  # (6, fish_h, fish_w, 2)


def _build_sampling_matrix(grids, face_h, face_w):
    """St[k, p]: bilinear weight of flattened cube pixel k (face-major) for fisheye pixel p.

    Exactly reproduces grid_sample(mode='bilinear', align_corners=True,
    padding_mode='zeros') followed by the sum over the 6 faces (face masks are disjoint).
    """
    n_faces, fish_h, fish_w, _ = grids.shape
    p_total = fish_h * fish_w
    k_total = n_faces * face_h * face_w
    st = np.zeros((k_total, p_total), dtype=np.float32)
    p_idx = np.arange(p_total, dtype=np.int64)
    for f in range(n_faces):
        gx = grids[f, ..., 0].reshape(-1).astype(np.float64)
        gy = grids[f, ..., 1].reshape(-1).astype(np.float64)
        ix = (gx + 1.0) * 0.5 * (face_w - 1)          # align_corners=True un-normalization
        iy = (gy + 1.0) * 0.5 * (face_h - 1)
        x0 = np.floor(ix).astype(np.int64)
        y0 = np.floor(iy).astype(np.int64)
        for dx in (0, 1):
            for dy in (0, 1):
                xx = x0 + dx
                yy = y0 + dy
                w = (1.0 - np.abs(ix - xx)) * (1.0 - np.abs(iy - yy))
                valid = (xx >= 0) & (xx <= face_w - 1) & (yy >= 0) & (yy <= face_h - 1)
                rows = f * face_h * face_w + yy * face_w + xx
                np.add.at(st, (rows[valid], p_idx[valid]), w[valid].astype(np.float32))
    return st  # out(M, P) = X(M, K) @ St(K, P)


def _pick_tk(k_total, cap=1024, lo=128):
    """Largest tk (multiple of 128, <= cap) that minimizes K padding."""
    best_tk, best_pad = None, None
    tk = cap
    while tk >= lo:
        pad = _round_up(max(k_total, 1), tk)
        if best_pad is None or pad < best_pad:
            best_tk, best_pad = tk, pad
        tk -= 128
    return best_tk, best_pad


def _active_kblocks(st_pad, tk, tp):
    """Per P-tile list of K-blocks holding any nonzero weight (block-sparse metadata).

    Inactive trailing slots repeat the last active block index so the pipelined DMA does
    not change block (no extra HBM traffic); the kernel skips them via n_active.
    """
    k_pad, p_pad = st_pad.shape
    n_k, n_p = k_pad // tk, p_pad // tp
    nz = st_pad.reshape(n_k, tk, n_p, tp).any(axis=(1, 3))      # (n_k, n_p)
    counts = nz.sum(axis=0).astype(np.int32)
    max_act = max(1, int(counts.max()))
    kblk = np.zeros((n_p, max_act), dtype=np.int32)
    for p in range(n_p):
        act = np.nonzero(nz[:, p])[0]
        if act.size:
            kblk[p, :act.size] = act
            kblk[p, act.size:] = act[-1]
    return kblk, counts


class _FisheyeOp(NamedTuple):
    st: jax.Array          # (k_pad, p_pad) sampling operator (bf16 or f32)
    kblk: jax.Array        # (n_p, max_act) int32 active K-block ids per P-tile
    nact: jax.Array        # (n_p,) int32 number of active K-blocks per P-tile
    tk: int
    tp: int
    k_total: int
    p_total: int
    k_pad: int
    p_pad: int


# --------------------------------------------------------------------------------------
# Pallas kernel: out(M=N*C*groups, P=fish_h*fish_w) = cast( X(M, K=6*H*W) @ St(K, P) )
# with block-sparse skipping of all-zero St K-blocks.
# --------------------------------------------------------------------------------------

def _make_fisheye_kernel(int_in_out: bool, use_scratch: bool):
    def _accumulate(kblk_ref, nact_ref, x_ref, st_ref, acc_ref):
        p = pl.program_id(0)
        k = pl.program_id(1)

        @pl.when(k == 0)
        def _init():
            acc_ref[...] = jnp.zeros_like(acc_ref)

        @pl.when(k < nact_ref[p])                    # skip padded / inactive K blocks
        def _accum():
            x = x_ref[...]
            if int_in_out:
                # uint8 pixels travel as raw int8 bits (1 B/elem in HBM); recover the
                # [0, 255] values with one cast + select and feed the MXU in bf16
                # (integers 0..255 are exactly representable in bf16).
                xf = x.astype(jnp.float32)
                xf = jnp.where(xf < 0.0, xf + 256.0, xf)
                x = xf.astype(jnp.bfloat16)
            acc_ref[...] += jnp.dot(x, st_ref[...], preferred_element_type=jnp.float32)

    if not use_scratch:
        # Float path: accumulate directly into the f32 output block; it stays resident in
        # VMEM across the K axis because the output index_map ignores k.
        def kernel(kblk_ref, nact_ref, x_ref, st_ref, o_ref):
            _accumulate(kblk_ref, nact_ref, x_ref, st_ref, o_ref)
        return kernel

    def kernel(kblk_ref, nact_ref, x_ref, st_ref, o_ref, acc_ref):
        _accumulate(kblk_ref, nact_ref, x_ref, st_ref, acc_ref)

        @pl.when(pl.program_id(1) == pl.num_programs(1) - 1)
        def _finalize():
            acc = acc_ref[...]
            if int_in_out:
                # bf16-rounded weights can overshoot 255 by <1; clamp before truncation.
                acc = jnp.clip(acc, 0.0, 255.0)
                y = acc.astype(jnp.int32)            # trunc toward 0 == Tensor.to(uint8)
                y = jnp.where(y > 127, y - 256, y)   # two's-complement bits of the uint8
                o_ref[...] = y.astype(jnp.int8)
            else:
                o_ref[...] = acc.astype(o_ref.dtype)

    return kernel


def _fisheye_matmul(x_m, op: _FisheyeOp, *, int_in_out: bool):
    m_pad, k_pad = x_m.shape
    assert k_pad == op.k_pad
    n_p = op.p_pad // op.tp
    max_act = op.kblk.shape[1]
    use_scratch = int_in_out
    out_dtype = jnp.int8 if int_in_out else jnp.float32

    st_b = np.dtype(op.st.dtype).itemsize
    x_b = np.dtype(x_m.dtype).itemsize
    o_b = np.dtype(out_dtype).itemsize
    vmem_need = (2 * op.tk * op.tp * st_b + 2 * m_pad * op.tk * x_b
                 + 2 * m_pad * op.tp * o_b + (m_pad * op.tp * 4 if use_scratch else 0))
    vmem_limit = int(min(max(vmem_need + (4 << 20), 16 << 20), 40 << 20))

    kernel = _make_fisheye_kernel(int_in_out, use_scratch)
    scratch = (pltpu.VMEM((m_pad, op.tp), jnp.float32),) if use_scratch else ()

    return pl.pallas_call(
        kernel,
        out_shape=jax.ShapeDtypeStruct((m_pad, op.p_pad), out_dtype),
        grid_spec=pltpu.PrefetchScalarGridSpec(
            num_scalar_prefetch=2,                    # kblk, nact -> SMEM
            grid=(n_p, max_act),                      # reduction (active-K) axis last
            in_specs=[
                # images: whole M block, K block chosen by the sparse schedule
                pl.BlockSpec((m_pad, op.tk), lambda p, k, kb, na: (0, kb[p, k])),
                # sampling operator tile (only the blocks with nonzero weight)
                pl.BlockSpec((op.tk, op.tp), lambda p, k, kb, na: (kb[p, k], p)),
            ],
            out_specs=pl.BlockSpec((m_pad, op.tp), lambda p, k, kb, na: (0, p)),
            scratch_shapes=scratch,
        ),
        # Output-tile axis is parallel (shards across v7x's two TensorCores); K carries
        # the accumulator so it stays "arbitrary".
        compiler_params=pltpu.CompilerParams(
            dimension_semantics=("parallel", "arbitrary"),
            vmem_limit_bytes=vmem_limit),
    )(op.kblk, op.nact, x_m, op.st)


# --------------------------------------------------------------------------------------
# Module wrapper (forward-pass equivalent of habitat's CubeMap2Fisheye)
# --------------------------------------------------------------------------------------

class CubeMap2Fisheye:
    """JAX/Pallas forward-pass equivalent of the PyTorch CubeMap2Fisheye obs transformer."""

    _TP_CAP = 1024          # lane-dense output tile (multiple of 128)
    _TK_CAP = 1024
    _M_CAP_U8 = 2048        # M-chunk safety valve (keeps tiles inside the VMEM budget)
    _M_CAP_F32 = 512

    def __init__(self, sensor_uuids, fish_shape, fish_fov, fish_params,
                 channels_last=False, target_uuids=None):
        num_sensors = len(sensor_uuids)
        assert num_sensors % 6 == 0 and num_sensors != 0, \
            f"{num_sensors}: length of sensors is not a multiple of 6"
        assert len(fish_shape) == 2
        assert len(fish_params) == 3
        self.sensor_uuids = list(sensor_uuids)
        self.fish_shape = (int(fish_shape[0]), int(fish_shape[1]))
        self.channels_last = channels_last
        fx = fish_params[0] * min(fish_shape)
        fy = fx
        cx = fish_shape[1] / 2
        cy = fish_shape[0] / 2
        xi = fish_params[1]
        alpha = fish_params[2]
        # Fixed fisheye sampling grids: init-time host precompute, same as the torch module.
        self._grids = _generate_grids(self.fish_shape[0], self.fish_shape[1], fish_fov,
                                      cx, cy, fx, fy, xi, alpha)
        self._dense_cache = {}   # (face_h, face_w) -> numpy St
        self._op_cache = {}      # (face_h, face_w, is_u8) -> _FisheyeOp
        if target_uuids is None:
            self.target_uuids = self.sensor_uuids[::6]
        else:
            self.target_uuids = list(target_uuids)
        # TODO(synk): transform_observation_space / from_config (gym & config plumbing)
        # are not ported; only the tensor forward pass is implemented here.

    # -- sampling operator (cached per face shape / dtype class) ------------------------

    def _sampling_operator(self, face_h, face_w, is_u8) -> _FisheyeOp:
        key = (face_h, face_w, bool(is_u8))
        if key in self._op_cache:
            return self._op_cache[key]
        dkey = (face_h, face_w)
        if dkey not in self._dense_cache:
            self._dense_cache[dkey] = _build_sampling_matrix(self._grids, face_h, face_w)
        st = self._dense_cache[dkey]
        k_total, p_total = st.shape
        tp = min(self._TP_CAP, _round_up(p_total, 128))
        p_pad = _round_up(p_total, tp)
        tk, k_pad = _pick_tk(k_total, cap=self._TK_CAP)
        st_pad = np.zeros((k_pad, p_pad), dtype=np.float32)
        st_pad[:k_total, :p_total] = st
        kblk, nact = _active_kblocks(st_pad, tk, tp)
        # bf16 St for uint8 sensors (halves the dominant HBM stream; <=1 LSB error);
        # f32 St for float sensors (bit-parity with torch's f32 grid_sample).
        st_dtype = jnp.bfloat16 if is_u8 else jnp.float32
        op = _FisheyeOp(st=jnp.asarray(st_pad, dtype=st_dtype),
                        kblk=jnp.asarray(kblk), nact=jnp.asarray(nact),
                        tk=tk, tp=tp, k_total=k_total, p_total=p_total,
                        k_pad=k_pad, p_pad=p_pad)
        self._op_cache[key] = op
        return op

    # -- per-group preprocessing / postprocessing ---------------------------------------

    def _prep_group(self, sensor_obs):
        # sensor_obs: 6 arrays, (N, H, W, C) when channels_last=False (habitat default),
        # otherwise already channel-first (N, C, H, W).  Mirrors the torch permutes.
        imgs = jnp.stack(sensor_obs, axis=1)              # (N, 6, ...)
        if self.channels_last:
            n, _, c, h, w = imgs.shape
            x = jnp.transpose(imgs, (0, 2, 1, 3, 4))      # (N, C, 6, H, W)
        else:
            n, _, h, w, c = imgs.shape
            x = jnp.transpose(imgs, (0, 4, 1, 2, 3))      # (N, C, 6, H, W)
        is_u8 = imgs.dtype == jnp.uint8
        if not (is_u8 or jnp.issubdtype(imgs.dtype, jnp.floating)):
            # TODO(synk): other integer sensor dtypes (e.g. int32 semantics) not implemented.
            raise NotImplementedError(f"unsupported sensor dtype {imgs.dtype}")
        x2 = x.reshape(n * c, 6 * h * w)                  # batch*channels folded into M
        if is_u8:
            # Reinterpret uint8 bytes as int8 so HBM only carries 1 B/pixel; values are
            # recovered in-kernel (no f32 HBM round trip).
            x2 = jax.lax.bitcast_convert_type(x2, jnp.int8)
        else:
            x2 = x2.astype(jnp.float32)
        return x2, int(n), int(c), int(h), int(w), bool(is_u8)

    def _postprocess(self, out_2d, n, c, sensor_dtype, is_u8):
        if is_u8:
            out_2d = jax.lax.bitcast_convert_type(out_2d, jnp.uint8)
        out = out_2d.reshape(n, c, self.fish_shape[0], self.fish_shape[1])
        if not self.channels_last:
            out = jnp.transpose(out, (0, 2, 3, 1))        # back to NHWC (torch permute)
        return out.astype(sensor_dtype)

    def _run(self, x2, h, w, is_u8):
        op = self._sampling_operator(h, w, is_u8)
        m = x2.shape[0]
        m_align = 32 if is_u8 else 8
        m_cap = self._M_CAP_U8 if is_u8 else self._M_CAP_F32
        outs = []
        for start in range(0, m, m_cap):
            chunk = x2[start:start + m_cap]
            mc = chunk.shape[0]
            mc_pad = _round_up(mc, m_align)
            chunk = jnp.pad(chunk, ((0, mc_pad - mc), (0, op.k_pad - op.k_total)))
            out = _fisheye_matmul(chunk, op, int_in_out=is_u8)
            outs.append(out[:mc, :op.p_total])
        return outs[0] if len(outs) == 1 else jnp.concatenate(outs, axis=0)

    # -- forward -------------------------------------------------------------------------

    def forward(self, observations):
        # Bucket target groups that share (face shape, dtype class) so the sampling
        # operator St is streamed from HBM once per bucket, not once per 6-sensor group.
        buckets = {}
        for i, target in enumerate(self.target_uuids):
            assert target in self.sensor_uuids[i * 6:(i + 1) * 6]
            sensor_obs = [observations[s] for s in self.sensor_uuids[i * 6:(i + 1) * 6]]
            sensor_dtype = observations[target].dtype
            x2, n, c, h, w, is_u8 = self._prep_group(sensor_obs)
            buckets.setdefault((h, w, is_u8), []).append((target, x2, n, c, sensor_dtype))
        # TODO(synk): folding the u8 and float buckets together (after widening) would
        # amortize St further but gives up the 1-byte uint8 HBM transport.
        for (h, w, is_u8), items in buckets.items():
            xs = [it[1] for it in items]
            x_all = xs[0] if len(xs) == 1 else jnp.concatenate(xs, axis=0)
            out_all = self._run(x_all, h, w, is_u8)       # (sum_m, P)
            off = 0
            for target, x2, n, c, sensor_dtype in items:
                m = x2.shape[0]
                observations[target] = self._postprocess(
                    out_all[off:off + m], n, c, sensor_dtype, is_u8)
                off += m
        return observations

    def __call__(self, observations):
        return self.forward(observations)


# --------------------------------------------------------------------------------------
# Pure-numpy reference (independent bilinear grid_sample + face sum) and demo.
# --------------------------------------------------------------------------------------

def _reference_fisheye(sensor_obs, grids):
    faces = np.stack([np.asarray(o, dtype=np.float32) for o in sensor_obs], axis=1)
    n, n_faces, h, w, c = faces.shape
    faces = np.transpose(faces, (0, 1, 4, 2, 3))          # (N, 6, C, H, W)
    fish_h, fish_w = grids.shape[1], grids.shape[2]
    out = np.zeros((n, c, fish_h, fish_w), dtype=np.float64)
    for f in range(n_faces):
        gx = grids[f, ..., 0].astype(np.float64)
        gy = grids[f, ..., 1].astype(np.float64)
        ix = (gx + 1.0) * 0.5 * (w - 1)
        iy = (gy + 1.0) * 0.5 * (h - 1)
        x0 = np.floor(ix).astype(np.int64)
        y0 = np.floor(iy).astype(np.int64)
        face = faces[:, f]                                # (N, C, H, W)
        for dx in (0, 1):
            for dy in (0, 1):
                xx = x0 + dx
                yy = y0 + dy
                wgt = (1.0 - np.abs(ix - xx)) * (1.0 - np.abs(iy - yy))
                valid = (xx >= 0) & (xx <= w - 1) & (yy >= 0) & (yy <= h - 1)
                xxc = np.clip(xx, 0, w - 1)
                yyc = np.clip(yy, 0, h - 1)
                out += (wgt * valid)[None, None] * face[:, :, yyc, xxc]
    return np.transpose(out, (0, 2, 3, 1))                # (N, fish_h, fish_w, C)


if __name__ == "__main__":
    key = jax.random.PRNGKey(0)
    N, H, W = 2, 16, 16                                   # 2 envs x 6 cube faces, 16x16 each
    FISH_H, FISH_W = 16, 16

    # Two uint8 RGB groups (exercises the St-amortizing group folding) + one f32 depth group.
    rgb_a = [f"rgb_a_{i}" for i in range(6)]              # Back, Down, Front, Left, Right, Up
    rgb_b = [f"rgb_b_{i}" for i in range(6)]
    depth = [f"depth_{i}" for i in range(6)]
    sensor_uuids = rgb_a + rgb_b + depth

    keys = jax.random.split(key, len(sensor_uuids))
    observations = {}
    for i, uuid in enumerate(rgb_a + rgb_b):
        observations[uuid] = jax.random.randint(
            keys[i], (N, H, W, 3), 0, 256, dtype=jnp.int32).astype(jnp.uint8)
    for j, uuid in enumerate(depth):
        observations[uuid] = jax.random.uniform(keys[12 + j], (N, H, W, 1), dtype=jnp.float32)

    transformer = CubeMap2Fisheye(
        sensor_uuids,
        fish_shape=(FISH_H, FISH_W),
        fish_fov=180.0,
        fish_params=(0.2, 0.2, 0.2),                      # (f, xi, alpha)
        channels_last=False,
    )

    out = transformer(dict(observations))
    fish_a = jax.block_until_ready(out["rgb_a_0"])
    fish_b = jax.block_until_ready(out["rgb_b_0"])
    fish_d = jax.block_until_ready(out["depth_0"])

    assert fish_a.shape == (N, FISH_H, FISH_W, 3) and fish_a.dtype == jnp.uint8
    assert fish_b.shape == (N, FISH_H, FISH_W, 3) and fish_b.dtype == jnp.uint8
    assert fish_d.shape == (N, FISH_H, FISH_W, 1) and fish_d.dtype == jnp.float32
    assert int(jnp.count_nonzero(fish_a)) > 0

    ref_a = _reference_fisheye([observations[u] for u in rgb_a], transformer._grids)
    ref_b = _reference_fisheye([observations[u] for u in rgb_b], transformer._grids)
    ref_d = _reference_fisheye([observations[u] for u in depth], transformer._grids)

    # uint8: bf16 sampling weights + truncation ties vs torch can differ by at most 1 LSB.
    np.testing.assert_allclose(np.asarray(fish_a).astype(np.int32),
                               ref_a.astype(np.uint8).astype(np.int32), atol=1)
    np.testing.assert_allclose(np.asarray(fish_b).astype(np.int32),
                               ref_b.astype(np.uint8).astype(np.int32), atol=1)
    np.testing.assert_allclose(np.asarray(fish_d), ref_d.astype(np.float32),
                               rtol=1e-5, atol=1e-5)

    print("KERNEL_OK")
</pallas_src>

<mosaic_0001>
module attributes {stable_mosaic.version = 11 : i64} {
  func.func @kernel(%arg0: i32, %arg1: i32, %arg2: memref<1x2xi32, #tpu.memory_space<smem>>, %arg3: memref<1xi32, #tpu.memory_space<smem>>, %arg4: memref<32x768xi8, #tpu.memory_space<vmem>>, %arg5: memref<768x256xbf16, #tpu.memory_space<vmem>>, %arg6: memref<32x256xi8, #tpu.memory_space<vmem>>, %arg7: memref<32x256xf32, #tpu.memory_space<vmem>>) attributes {dimension_semantics = [#tpu.dimension_semantics<parallel>, #tpu.dimension_semantics<arbitrary>], iteration_bounds = array<i64: 1, 2>, scalar_prefetch = 2 : i64, scratch_operands = 1 : i64, tpu.core_type = #tpu.core_type<tc>, window_params = [{transform_indices = @transform_0, window_bounds = array<i64: 32, 768>}, {transform_indices = @transform_1, window_bounds = array<i64: 768, 256>}, {transform_indices = @transform_2, window_bounds = array<i64: 32, 256>}]} {
    %c0_i32 = arith.constant 0 : i32
    %0 = arith.cmpi eq, %arg1, %c0_i32 : i32
    %1 = arith.extui %0 : i1 to i32
    %c0_i32_0 = arith.constant 0 : i32
    %2 = arith.cmpi ne, %1, %c0_i32_0 : i32
    scf.if %2 {
      %cst = arith.constant 0.000000e+00 : f32
      %11 = vector.broadcast %cst : f32 to vector<32x256xf32>
      %c0 = arith.constant 0 : index
      %c0_3 = arith.constant 0 : index
      %12 = vector.load %arg7[%c0, %c0_3] : memref<32x256xf32, #tpu.memory_space<vmem>>, vector<32x256xf32>
      tpu.vector_store %arg7[%c0, %c0_3], %11 {strides = array<i32>} : memref<32x256xf32, #tpu.memory_space<vmem>>, vector<32x256xf32>,
    } else {
    }
    %3 = arith.index_cast %arg0 : i32 to index
    %4 = memref.load %arg3[%3] : memref<1xi32, #tpu.memory_space<smem>>
    %5 = arith.cmpi slt, %arg1, %4 : i32
    %6 = arith.extui %5 : i1 to i32
    %c0_i32_1 = arith.constant 0 : i32
    %7 = arith.cmpi ne, %6, %c0_i32_1 : i32
    scf.if %7 {
      %c0 = arith.constant 0 : index
      %c0_3 = arith.constant 0 : index
      %11 = vector.load %arg4[%c0, %c0_3] : memref<32x768xi8, #tpu.memory_space<vmem>>, vector<32x768xi8>
      %12 = arith.sitofp %11 : vector<32x768xi8> to vector<32x768xf32>
      %cst = arith.constant 0.000000e+00 : f32
      %13 = vector.broadcast %cst : f32 to vector<32x768xf32>
      %14 = arith.cmpf olt, %12, %13 : vector<32x768xf32>
      %cst_4 = arith.constant 2.560000e+02 : f32
      %15 = vector.broadcast %cst_4 : f32 to vector<32x768xf32>
      %16 = arith.addf %12, %15 : vector<32x768xf32>
      %17 = arith.select %14, %16, %12 : vector<32x768xi1>, vector<32x768xf32>
      %18 = arith.truncf %17 : vector<32x768xf32> to vector<32x768xbf16>
      %c0_5 = arith.constant 0 : index
      %c0_6 = arith.constant 0 : index
      %19 = vector.load %arg7[%c0_5, %c0_6] : memref<32x256xf32, #tpu.memory_space<vmem>>, vector<32x256xf32>
      %c0_7 = arith.constant 0 : index
      %c0_8 = arith.constant 0 : index
      %20 = vector.load %arg5[%c0_7, %c0_8] : memref<768x256xbf16, #tpu.memory_space<vmem>>, vector<768x256xbf16>
      %cst_9 = arith.constant dense<0.000000e+00> : vector<32x256xf32>
      %21 = tpu.matmul %18, %20, %cst_9 {dimension_numbers = #tpu.dot_dimension_numbers<[1], [0], [0], [1], [0, 0, 1, 1], [], []>} : vector<32x768xbf16>, vector<768x256xbf16>, vector<32x256xf32> -> vector<32x256xf32>
      %22 = arith.addf %19, %21 : vector<32x256xf32>
      %c0_10 = arith.constant 0 : index
      %c0_11 = arith.constant 0 : index
      %23 = vector.load %arg7[%c0_10, %c0_11] : memref<32x256xf32, #tpu.memory_space<vmem>>, vector<32x256xf32>
      tpu.vector_store %arg7[%c0_10, %c0_11], %22 {strides = array<i32>} : memref<32x256xf32, #tpu.memory_space<vmem>>, vector<32x256xf32>,
    } else {
    }
    %c1_i32 = arith.constant 1 : i32
    %8 = arith.cmpi eq, %arg1, %c1_i32 : i32
    %9 = arith.extui %8 : i1 to i32
    %c0_i32_2 = arith.constant 0 : i32
    %10 = arith.cmpi ne, %9, %c0_i32_2 : i32
    scf.if %10 {
      %c0 = arith.constant 0 : index
      %c0_3 = arith.constant 0 : index
      %11 = vector.load %arg7[%c0, %c0_3] : memref<32x256xf32, #tpu.memory_space<vmem>>, vector<32x256xf32>
      %cst = arith.constant 0.000000e+00 : f32
      %cst_4 = arith.constant 2.550000e+02 : f32
      %12 = vector.broadcast %cst : f32 to vector<32x256xf32>
      %13 = arith.maximumf %12, %11 : vector<32x256xf32>
      %14 = vector.broadcast %cst_4 : f32 to vector<32x256xf32>
      %15 = arith.minimumf %14, %13 : vector<32x256xf32>
      %16 = arith.fptosi %15 : vector<32x256xf32> to vector<32x256xi32>
      %c127_i32 = arith.constant 127 : i32
      %17 = vector.broadcast %c127_i32 : i32 to vector<32x256xi32>
      %18 = arith.cmpi sgt, %16, %17 : vector<32x256xi32>
      %c256_i32 = arith.constant 256 : i32
      %19 = vector.broadcast %c256_i32 : i32 to vector<32x256xi32>
      %20 = arith.subi %16, %19 : vector<32x256xi32>
      %21 = arith.select %18, %20, %16 : vector<32x256xi1>, vector<32x256xi32>
      %22 = arith.trunci %21 : vector<32x256xi32> to vector<32x256xi8>
      %c0_5 = arith.constant 0 : index
      %c0_6 = arith.constant 0 : index
      %23 = vector.load %arg6[%c0_5, %c0_6] : memref<32x256xi8, #tpu.memory_space<vmem>>, vector<32x256xi8>
      tpu.vector_store %arg6[%c0_5, %c0_6], %22 {strides = array<i32>} : memref<32x256xi8, #tpu.memory_space<vmem>>, vector<32x256xi8>,
    } else {
    }
    return
  }
  func.func @transform_0(%arg0: i32, %arg1: i32, %arg2: memref<1x2xi32, #tpu.memory_space<smem>>, %arg3: memref<1xi32, #tpu.memory_space<smem>>) -> (i32, i32) {
    %0 = arith.index_cast %arg0 : i32 to index
    %1 = arith.index_cast %arg1 : i32 to index
    %2 = memref.load %arg2[%0, %1] : memref<1x2xi32, #tpu.memory_space<smem>>
    %c0_i32 = arith.constant 0 : i32
    %c0_i32_0 = arith.constant 0 : i32
    return %c0_i32, %2 : i32, i32
  }
  func.func @transform_1(%arg0: i32, %arg1: i32, %arg2: memref<1x2xi32, #tpu.memory_space<smem>>, %arg3: memref<1xi32, #tpu.memory_space<smem>>) -> (i32, i32) {
    %0 = arith.index_cast %arg0 : i32 to index
    %1 = arith.index_cast %arg1 : i32 to index
    %2 = memref.load %arg2[%0, %1] : memref<1x2xi32, #tpu.memory_space<smem>>
    %c0_i32 = arith.constant 0 : i32
    return %2, %arg0 : i32, i32
  }
  func.func @transform_2(%arg0: i32, %arg1: i32, %arg2: memref<1x2xi32, #tpu.memory_space<smem>>, %arg3: memref<1xi32, #tpu.memory_space<smem>>) -> (i32, i32) {
    %c0_i32 = arith.constant 0 : i32
    %c0_i32_0 = arith.constant 0 : i32
    return %c0_i32, %arg0 : i32, i32
  }
}

</mosaic_0001>

<llo_original>
// kernel: tpu_custom_call.1
$region0: #{tpu_custom_call.1}
  #allocation0 [shape = 'u32[]', space=smem, size = 0x4, offset = 0x4, fixed_abs, tag = 'smem constant byte address 0x4 - core index']
  #allocation1 [shape = 'u32[144,128]{1,0:T(1,128)}', space=vmem, size = 0x12000, scoped, tag = 'internal scratch']
  #allocation2 [shape = 'f32[32,256]{1,0:T(8,128)}', space=vmem, size = 0x8000, scoped, tag = 'scratch operand']
  #allocation3 [shape = 's32[1]{0}', space=sflag, size = 0x4, scoped, tag = 'scoped memory for tpu_custom_call.1']
  #allocation4 [shape = 'u8[512]{0}', space=smem, size = 0x200, scoped, tag = 'prefetched SMEM operand 0']
  #allocation5 [shape = 's32[1]{0:T(128)S(6)}', space=smem, size = 0x200, scoped, tag = 'prefetched SMEM operand 1']
  %s0 = inlined_call_operand.vmem [shape: s32[1,2], index: 0, kind: input, shape index: {}]
  %s1 = inlined_call_operand.<no memory space> [shape: s32[1], index: 1, kind: input, shape index: {}]
  %s2 = inlined_call_operand.hbm [shape: s8[32,1536], index: 2, kind: input, shape index: {}]
  %s3 = inlined_call_operand.hbm [shape: bf16[1536,256], index: 3, kind: input, shape index: {}]
  %s4 = inlined_call_operand.hbm [shape: s8[32,256], index: 4, kind: output, shape index: {}]
  %s5 = sld [smem:[#allocation0]]
  $region61: #{tpu_custom_call.1} parent=0
    _
  %s7 = ssub.s32 1, %s5
  %s8 = scalar_select 0, %s7, %s5
  %s9 = sshll.u32 %s0, 4
  %s10 = int_to_ptr.vmem [resolvable:$true] %s9
  %12 = dma.vmem_to_smem %s10, 16, [#allocation4], [#allocation3]
  %13 = sst [smem:[#allocation5]] %s1
  %14 = dma.done [#allocation3], 16
  %15 = sfence
  $region1: #{tpu_custom_call.1} parent=0
    #allocation6 [shape = 'u8[49152]{0}', space=vmem, size = 0xc000, scoped, tag = 'input window, operand 2']
    #allocation7 [shape = 's32[2]{0}', space=sflag, size = 0x8, scoped, tag = 'scoped memory for tpu_custom_call.1']
    #allocation8 [shape = 's32[2]{0}', space=sflag, size = 0x8, scoped, tag = 'scoped memory for tpu_custom_call.1']
    #allocation9 [shape = 'u8[786432]{0}', space=vmem, size = 0xc0000, scoped, tag = 'input window, operand 3']
    #allocation10 [shape = 's32[2]{0}', space=sflag, size = 0x8, scoped, tag = 'scoped memory for tpu_custom_call.1']
    #allocation11 [shape = 'u8[8192]{0}', space=vmem, size = 0x2000, scoped, tag = 'output window, operand 0, single buffered']
    %16 = vsyncpa [#allocation7], 0
    %s17 = scalar_lea.sflag [#allocation7], 1
    %18 = vsyncpa %s17, 0
    %19 = vsyncpa [#allocation10], 0
    %s20 = scalar_lea.sflag [#allocation10], 1
    %21 = vsyncpa %s20, 0
    %22 = vsyncpa [#allocation8], 0
    loop: start=0, step=1, limit=4
    $region2: #{tpu_custom_call.1} parent=1 // loop_pre_header
      _
    $region3: #{tpu_custom_call.1} parent=1 // loop_header
      %s24 = sphi 0, %s28
      %p25 = scmp.ge.s32.totalorder %s24, 4
      %s31 = sphi 0, %s43
      %s32 = sphi 0, %s39
      %s33 = sphi 0, %s31
      %s34 = sphi 0, %s32
      %s35 = sphi 0, %s33
      %s36 = sphi 0, %s34
      %s62 = sphi 0, %s64
      %s65 = sphi 0, %s62
      %s66 = sphi 0, %s65
      %s82 = sphi 0, %s66
      %s106 = sphi 0, %s108
      %s109 = sphi 0, %s106
      %s110 = sphi 0, %s109
      %s126 = sphi 0, %s110
      %s132 = sphi 0, %s134
      %s135 = sphi 0, %s132
      %s136 = sphi 0, %s135
      %s152 = sphi 0, %s136
    $region4: #{tpu_custom_call.1} parent=1 // loop_header_branch
      %27 = sbr.rel (%p25) target = $region8
    $region5: #{tpu_custom_call.1} parent=1 // loop_body
      %s29 = ssub.s32 %s24, 1
      %s30 = ssub.s32 %s24, 2
      %s37 = sadd.s32 1, %s32
      %p38 = scmp.ge.s32.totalorder %s37, 2
      %s39 = scalar_select %p38, 0, %s37
      %s40 = sadd.s32 1, %s31
      %s41 = scalar_select %p38, %s40, %s31
      %p42 = scmp.ge.s32.totalorder %s41, 1
      %s43 = scalar_select %p42, 0, %s41
      %s44 = sshra.s32 %s32, 7
      %s45 = sand.u32 %s32, 127
      %s46 = sadd.s32 %s44, %s31
      %s47 = smul.u32 %s46, 128
      %s48 = sshra.s32 %s32, 7
      %s49 = sand.u32 %s32, 127
      %s50 = sadd.s32 %s47, %s49
      %s51 = sld [smem:[#allocation4 + %s50]]
      %s52 = sshra.s32 %s39, 7
      %s53 = sand.u32 %s39, 127
      %s54 = sadd.s32 %s52, %s43
      %s55 = smul.u32 %s54, 128
      %s56 = sshra.s32 %s39, 7
      %s57 = sand.u32 %s39, 127
      %s58 = sadd.s32 %s55, %s57
      %s59 = sld [smem:[#allocation4 + %s58]]
      %s60 = ssub.s32 %s51, %s59
      %p61 = scmp.eq.s32.totalorder %s60, 0
      %s63 = sadd.s32 %s62, 1
      %s64 = scalar_select %p61, %s62, %s63
      %p67 = pneg %p61
      %p68 = scmp.eq.s32.totalorder %s24, 1
      %p69 = por %p67, %p68
      %p70 = scmp.ne.s32.totalorder %s62, %s65
      %p71 = scmp.eq.s32.totalorder %s24, 0
      %p72 = por %p70, %p71
      %p73 = scmp.ne.s32.totalorder %s62, %s65
      %p74 = scmp.eq.s32.totalorder %s29, 1
      %p75 = por %p73, %p74
      %p76 = scmp.ne.s32.totalorder %s65, %s66
      %p77 = scmp.eq.s32.totalorder %s29, 0
      %p78 = por %p76, %p77
      %p79 = scmp.ne.s32.totalorder %s65, %s66
      %p80 = scmp.eq.s32.totalorder %s30, 1
      %p81 = por %p79, %p80
      %p83 = scmp.ne.s32.totalorder %s66, %s82
      %p84 = scmp.eq.s32.totalorder %s30, 0
      %p85 = por %p83, %p84
      %s86 = sshra.s32 %s32, 7
      %s87 = sand.u32 %s32, 127
      %s88 = sadd.s32 %s86, %s31
      %s89 = smul.u32 %s88, 128
      %s90 = sshra.s32 %s32, 7
      %s91 = sand.u32 %s32, 127
      %s92 = sadd.s32 %s89, %s91
      %s93 = sld [smem:[#allocation4 + %s92]]
      %s94 = sshra.s32 %s39, 7
      %s95 = sand.u32 %s39, 127
      %s96 = sadd.s32 %s94, %s43
      %s97 = smul.u32 %s96, 128
      %s98 = sshra.s32 %s39, 7
      %s99 = sand.u32 %s39, 127
      %s100 = sadd.s32 %s97, %s99
      %s101 = sld [smem:[#allocation4 + %s100]]
      %s102 = ssub.s32 %s93, %s101
      %s103 = ssub.s32 %s31, %s43
      %s104 = sor.u32 %s102, %s103
      %p105 = scmp.eq.s32.totalorder %s104, 0
      %s107 = sadd.s32 %s106, 1
      %s108 = scalar_select %p105, %s106, %s107
      %p111 = pneg %p105
      %p112 = scmp.eq.s32.totalorder %s24, 1
      %p113 = por %p111, %p112
      %p114 = scmp.ne.s32.totalorder %s106, %s109
      %p115 = scmp.eq.s32.totalorder %s24, 0
      %p116 = por %p114, %p115
      %p117 = scmp.ne.s32.totalorder %s106, %s109
      %p118 = scmp.eq.s32.totalorder %s29, 1
      %p119 = por %p117, %p118
      %p120 = scmp.ne.s32.totalorder %s109, %s110
      %p121 = scmp.eq.s32.totalorder %s29, 0
      %p122 = por %p120, %p121
      %p123 = scmp.ne.s32.totalorder %s109, %s110
      %p124 = scmp.eq.s32.totalorder %s30, 1
      %p125 = por %p123, %p124
      %p127 = scmp.ne.s32.totalorder %s110, %s126
      %p128 = scmp.eq.s32.totalorder %s30, 0
      %p129 = por %p127, %p128
      %s130 = ssub.s32 %s31, %s43
      %p131 = scmp.eq.s32.totalorder %s130, 0
      %s133 = sadd.s32 %s132, 1
      %s134 = scalar_select %p131, %s132, %s133
      %p137 = pneg %p131
      %p138 = scmp.eq.s32.totalorder %s24, 1
      %p139 = por %p137, %p138
      %p140 = scmp.ne.s32.totalorder %s132, %s135
      %p141 = scmp.eq.s32.totalorder %s24, 0
      %p142 = por %p140, %p141
      %p143 = scmp.ne.s32.totalorder %s132, %s135
      %p144 = scmp.eq.s32.totalorder %s29, 1
      %p145 = por %p143, %p144
      %p146 = scmp.ne.s32.totalorder %s135, %s136
      %p147 = scmp.eq.s32.totalorder %s29, 0
      %p148 = por %p146, %p147
      %p149 = scmp.ne.s32.totalorder %s135, %s136
      %p150 = scmp.eq.s32.totalorder %s30, 1
      %p151 = por %p149, %p150
      %p153 = scmp.ne.s32.totalorder %s136, %s152
      %p154 = scmp.eq.s32.totalorder %s30, 0
      %p155 = por %p153, %p154
      %p156 = scmp.le.s32.totalorder 1, %s24
      %p157 = scmp.lt.s32.totalorder %s24, 3
      %p158 = pnand %p156, %p157
      %p159 = pneg %p158
      // Predicated region
      $region9: #{tpu_custom_call.1} parent=5 // pred_check
        _
      $region10: #{tpu_custom_call.1} parent=5 // pred_check_branch
        %161 = sbr.rel (%p158) target = $region12
      $region11: #{tpu_custom_call.1} parent=5 // pred_region
        %s162 = ssub.s32 %s24, 1
      $region12: #{tpu_custom_call.1} parent=5 // pred_fallthru
        _
      %p163 = scmp.lt.s32.totalorder %s24, 2
      // Predicated region
      $region13: #{tpu_custom_call.1} parent=5 // pred_check
        %p164 = pneg %p163
      $region14: #{tpu_custom_call.1} parent=5 // pred_check_branch
        %166 = sbr.rel (%p164) target = $region16
      $region15: #{tpu_custom_call.1} parent=5 // pred_region
        // Predicated region
        $region17: #{tpu_custom_call.1} parent=15 // pred_check
          %p167 = pneg %p72
        $region18: #{tpu_custom_call.1} parent=15 // pred_check_branch
          %169 = sbr.rel (%p167) target = $region20
        $region19: #{tpu_custom_call.1} parent=15 // pred_region
          %s170 = sand.u32 %s62, 1
          %s171 = scalar_lea.sflag [#allocation7], %s170
          %s172 = sand.u32 %s62, 1
          %s173 = smul.addr %s172, 48
          %s174 = scalar_lea.vmem [#allocation6], %s173
          %s175 = sshra.s32 %s32, 7
          %s176 = sand.u32 %s32, 127
          %s177 = sadd.s32 %s175, %s31
          %s178 = smul.u32 %s177, 128
          %s179 = sshra.s32 %s32, 7
          %s180 = sand.u32 %s32, 127
          %s181 = sadd.s32 %s178, %s180
          %s182 = sld [smem:[#allocation4 + %s181]]
          %s183 = smul.u32 6, %s182
          %s185 = ssub.s32 768, 768
          %186 = vsyncadd %s171, %s185
          %s187 = smul.addr %s183, 128
          %s188 = scalar_lea.hbm %s2, %s187
          %s190 = sshll.u32 %s174, 4
          %s191 = int_to_ptr.vmem [resolvable:$true] %s190
          %193 = dma.hbm_to_vmem [thread:$0]  %s188, 768, %s191, %s171
        $region20: #{tpu_custom_call.1} parent=15 // pred_fallthru
          _
        // Predicated region
        $region21: #{tpu_custom_call.1} parent=15 // pred_check
          %p194 = pneg %p116
        $region22: #{tpu_custom_call.1} parent=15 // pred_check_branch
          %196 = sbr.rel (%p194) target = $region24
        $region23: #{tpu_custom_call.1} parent=15 // pred_region
          %s197 = sand.u32 %s106, 1
          %s198 = scalar_lea.sflag [#allocation10], %s197
          %s199 = sand.u32 %s106, 1
          %s200 = smul.addr %s199, 768
          %s201 = scalar_lea.vmem [#allocation9], %s200
          %s202 = sshra.s32 %s32, 7
          %s203 = sand.u32 %s32, 127
          %s204 = sadd.s32 %s202, %s31
          %s205 = smul.u32 %s204, 128
          %s206 = sshra.s32 %s32, 7
          %s207 = sand.u32 %s32, 127
          %s208 = sadd.s32 %s205, %s207
          %s209 = sld [smem:[#allocation4 + %s208]]
          %s210 = smul.u32 96, %s209
          %s211 = smul.u32 2, %s31
          %s213 = ssub.s32 12288, 12288
          %214 = vsyncadd %s198, %s213
          %s215 = smul.addr %s210, 2
          %s216 = sadd.s32 %s211, %s215
          %s217 = smul.addr %s216, 64
          %s218 = scalar_lea.hbm %s3, %s217
          %s219 = sshll.u32 %s201, 4
          %s220 = int_to_ptr.vmem [resolvable:$true] %s219
          %225 = dma.hbm_to_vmem [thread:$0]  %s218, 12288, %s220, %s198, 128, 128, 8
        $region24: #{tpu_custom_call.1} parent=15 // pred_fallthru
          _
      $region16: #{tpu_custom_call.1} parent=5 // pred_fallthru
        _
      %p226 = scmp.le.s32.totalorder 1, %s24
      %p227 = scmp.lt.s32.totalorder %s24, 3
      %p228 = pnand %p226, %p227
      %p229 = pneg %p228
      // Predicated region
      $region25: #{tpu_custom_call.1} parent=5 // pred_check
        _
      $region26: #{tpu_custom_call.1} parent=5 // pred_check_branch
        %231 = sbr.rel (%p228) target = $region28
      $region27: #{tpu_custom_call.1} parent=5 // pred_region
        %s232 = ssub.s32 %s24, 1
        %s233 = sand.u32 %s65, 1
        %s234 = scalar_lea.sflag [#allocation7], %s233
        %s235 = sand.u32 %s65, 1
        %s236 = smul.addr %s235, 48
        %s237 = scalar_lea.vmem [#allocation6], %s236
        // Predicated region
        $region29: #{tpu_custom_call.1} parent=27 // pred_check
          %p238 = pneg %p78
        $region30: #{tpu_custom_call.1} parent=27 // pred_check_branch
          %240 = sbr.rel (%p238) target = $region32
        $region31: #{tpu_custom_call.1} parent=27 // pred_region
          %241 = dma.done %s234, 768
        $region32: #{tpu_custom_call.1} parent=27 // pred_fallthru
          _
        %s242 = sand.u32 %s109, 1
        %s243 = scalar_lea.sflag [#allocation10], %s242
        %s244 = sand.u32 %s109, 1
        %s245 = smul.addr %s244, 768
        %s246 = scalar_lea.vmem [#allocation9], %s245
        // Predicated region
        $region33: #{tpu_custom_call.1} parent=27 // pred_check
          %p247 = pneg %p122
        $region34: #{tpu_custom_call.1} parent=27 // pred_check_branch
          %249 = sbr.rel (%p247) target = $region36
        $region35: #{tpu_custom_call.1} parent=27 // pred_region
          %250 = dma.done %s243, 12288
        $region36: #{tpu_custom_call.1} parent=27 // pred_fallthru
          _
        %s251 = sand.u32 %s65, 1
        %s252 = scalar_lea.sflag [#allocation7], %s251
        %s253 = sand.u32 %s65, 1
        %s254 = smul.addr %s253, 48
        %s255 = scalar_lea.vmem [#allocation6], %s254
        %p256 = pneg %p78
        %p257 = pneg %p75
        %s258 = sand.u32 %s109, 1
        %s259 = scalar_lea.sflag [#allocation10], %s258
        %s260 = sand.u32 %s109, 1
        %s261 = smul.addr %s260, 768
        %s262 = scalar_lea.vmem [#allocation9], %s261
        %p263 = pneg %p122
        %p264 = pneg %p119
        %p265 = pneg %p148
        %p266 = pneg %p145
        %s267 = sshra.s32 %s34, 7
        %s268 = sand.u32 %s34, 127
        %s269 = sadd.s32 %s267, %s33
        %s270 = smul.u32 %s269, 128
        %s271 = sshra.s32 %s34, 7
        %s272 = sand.u32 %s34, 127
        %s273 = sadd.s32 %s270, %s272
        %s274 = sld [smem:[#allocation4 + %s273]]
        %s275 = smul.u32 6, %s274
        %s276 = sshra.s32 %s34, 7
        %s277 = sand.u32 %s34, 127
        %s278 = sadd.s32 %s276, %s33
        %s279 = smul.u32 %s278, 128
        %s280 = sshra.s32 %s34, 7
        %s281 = sand.u32 %s34, 127
        %s282 = sadd.s32 %s279, %s281
        %s283 = sld [smem:[#allocation4 + %s282]]
        %s284 = smul.u32 96, %s283
        %s285 = smul.u32 2, %s33
        %s286 = smul.u32 2, %s33
        %p287 = scmp.eq.s32.totalorder %s34, 0
        // Predicated region
        $region37: #{tpu_custom_call.1} parent=27 // pred_check
          %p288 = pneg %p287
        $region38: #{tpu_custom_call.1} parent=27 // pred_check_branch
          %290 = sbr.rel (%p288) target = $region40
        $region39: #{tpu_custom_call.1} parent=27 // pred_region
          %291 = vst [vmem:[#allocation2] sm:$0xff] 0.0
          %292 = vst [vmem:[#allocation2 + $0x8] sm:$0xff] 0.0
          %293 = vst [vmem:[#allocation2 + $0x10] sm:$0xff] 0.0
          %294 = vst [vmem:[#allocation2 + $0x18] sm:$0xff] 0.0
          %295 = vst [vmem:[#allocation2 + $0x20] sm:$0xff] 0.0
          %296 = vst [vmem:[#allocation2 + $0x28] sm:$0xff] 0.0
          %297 = vst [vmem:[#allocation2 + $0x30] sm:$0xff] 0.0
          %298 = vst [vmem:[#allocation2 + $0x38] sm:$0xff] 0.0
        $region40: #{tpu_custom_call.1} parent=27 // pred_fallthru
          _
        %s299 = sld [smem:[#allocation5 + %s33]]
        %p300 = scmp.lt.s32.totalorder %s34, %s299
        // Predicated region
        $region41: #{tpu_custom_call.1} parent=27 // pred_check
          %p301 = pneg %p300
        $region42: #{tpu_custom_call.1} parent=27 // pred_check_branch
          %303 = sbr.rel (%p301) target = $region44
        $region43: #{tpu_custom_call.1} parent=27 // pred_region
          %v304 = vld [vmem:[%s237] sm:$0xff]
          %v305 = vld [vmem:[%s237 + $0x8] sm:$0xff]
          %v306 = vld [vmem:[%s237 + $0x10] sm:$0xff]
          %v307 = vld [vmem:[%s237 + $0x18] sm:$0xff]
          %v308 = vld [vmem:[%s237 + $0x20] sm:$0xff]
          %v309 = vld [vmem:[%s237 + $0x28] sm:$0xff]
          %v310 = vunpack.c.0.s8 %v304
          %v311 = vunpack.c.0.s8 %v305
          %v312 = vunpack.c.0.s8 %v306
          %v313 = vunpack.c.0.s8 %v307
          %v314 = vunpack.c.0.s8 %v308
          %v315 = vunpack.c.0.s8 %v309
          %v316 = vunpack.c.1.s8 %v304
          %v317 = vunpack.c.1.s8 %v305
          %v318 = vunpack.c.1.s8 %v306
          %v319 = vunpack.c.1.s8 %v307
          %v320 = vunpack.c.1.s8 %v308
          %v321 = vunpack.c.1.s8 %v309
          %v322 = vunpack.c.2.s8 %v304
          %v323 = vunpack.c.2.s8 %v305
          %v324 = vunpack.c.2.s8 %v306
          %v325 = vunpack.c.2.s8 %v307
          %v326 = vunpack.c.2.s8 %v308
          %v327 = vunpack.c.2.s8 %v309
          %v328 = vunpack.c.3.s8 %v304
          %v329 = vunpack.c.3.s8 %v305
          %v330 = vunpack.c.3.s8 %v306
          %v331 = vunpack.c.3.s8 %v307
          %v332 = vunpack.c.3.s8 %v308
          %v333 = vunpack.c.3.s8 %v309
          %v334 = vcvt.s32.f32 %v310
          %v335 = vcvt.s32.f32 %v311
          %v336 = vcvt.s32.f32 %v312
          %v337 = vcvt.s32.f32 %v313
          %v338 = vcvt.s32.f32 %v314
          %v339 = vcvt.s32.f32 %v315
          %v340 = vcvt.s32.f32 %v316
          %v341 = vcvt.s32.f32 %v317
          %v342 = vcvt.s32.f32 %v318
          %v343 = vcvt.s32.f32 %v319
          %v344 = vcvt.s32.f32 %v320
          %v345 = vcvt.s32.f32 %v321
          %v346 = vcvt.s32.f32 %v322
          %v347 = vcvt.s32.f32 %v323
          %v348 = vcvt.s32.f32 %v324
          %v349 = vcvt.s32.f32 %v325
          %v350 = vcvt.s32.f32 %v326
          %v351 = vcvt.s32.f32 %v327
          %v352 = vcvt.s32.f32 %v328
          %v353 = vcvt.s32.f32 %v329
          %v354 = vcvt.s32.f32 %v330
          %v355 = vcvt.s32.f32 %v331
          %v356 = vcvt.s32.f32 %v332
          %v357 = vcvt.s32.f32 %v333
          %vm358 = vcmp.lt.f32.partialorder %v334, 0.0
          %vm359 = vcmp.lt.f32.partialorder %v335, 0.0
          %vm360 = vcmp.lt.f32.partialorder %v336, 0.0
          %vm361 = vcmp.lt.f32.partialorder %v337, 0.0
          %vm362 = vcmp.lt.f32.partialorder %v338, 0.0
          %vm363 = vcmp.lt.f32.partialorder %v339, 0.0
          %vm364 = vcmp.lt.f32.partialorder %v340, 0.0
          %vm365 = vcmp.lt.f32.partialorder %v341, 0.0
          %vm366 = vcmp.lt.f32.partialorder %v342, 0.0
          %vm367 = vcmp.lt.f32.partialorder %v343, 0.0
          %vm368 = vcmp.lt.f32.partialorder %v344, 0.0
          %vm369 = vcmp.lt.f32.partialorder %v345, 0.0
          %vm370 = vcmp.lt.f32.partialorder %v346, 0.0
          %vm371 = vcmp.lt.f32.partialorder %v347, 0.0
          %vm372 = vcmp.lt.f32.partialorder %v348, 0.0
          %vm373 = vcmp.lt.f32.partialorder %v349, 0.0
          %vm374 = vcmp.lt.f32.partialorder %v350, 0.0
          %vm375 = vcmp.lt.f32.partialorder %v351, 0.0
          %vm376 = vcmp.lt.f32.partialorder %v352, 0.0
          %vm377 = vcmp.lt.f32.partialorder %v353, 0.0
          %vm378 = vcmp.lt.f32.partialorder %v354, 0.0
          %vm379 = vcmp.lt.f32.partialorder %v355, 0.0
          %vm380 = vcmp.lt.f32.partialorder %v356, 0.0
          %vm381 = vcmp.lt.f32.partialorder %v357, 0.0
          %v382 = vadd.f32 %v334, 256.0
          %v383 = vadd.f32 %v335, 256.0
          %v384 = vadd.f32 %v336, 256.0
          %v385 = vadd.f32 %v337, 256.0
          %v386 = vadd.f32 %v338, 256.0
          %v387 = vadd.f32 %v339, 256.0
          %v388 = vadd.f32 %v340, 256.0
          %v389 = vadd.f32 %v341, 256.0
          %v390 = vadd.f32 %v342, 256.0
          %v391 = vadd.f32 %v343, 256.0
          %v392 = vadd.f32 %v344, 256.0
          %v393 = vadd.f32 %v345, 256.0
          %v394 = vadd.f32 %v346, 256.0
          %v395 = vadd.f32 %v347, 256.0
          %v396 = vadd.f32 %v348, 256.0
          %v397 = vadd.f32 %v349, 256.0
          %v398 = vadd.f32 %v350, 256.0
          %v399 = vadd.f32 %v351, 256.0
          %v400 = vadd.f32 %v352, 256.0
          %v401 = vadd.f32 %v353, 256.0
          %v402 = vadd.f32 %v354, 256.0
          %v403 = vadd.f32 %v355, 256.0
          %v404 = vadd.f32 %v356, 256.0
          %v405 = vadd.f32 %v357, 256.0
          %v406 = vsel %vm358, %v382, %v334
          %v407 = vsel %vm359, %v383, %v335
          %v408 = vsel %vm360, %v384, %v336
          %v409 = vsel %vm361, %v385, %v337
          %v410 = vsel %vm362, %v386, %v338
          %v411 = vsel %vm363, %v387, %v339
          %v412 = vsel %vm364, %v388, %v340
          %v413 = vsel %vm365, %v389, %v341
          %v414 = vsel %vm366, %v390, %v342
          %v415 = vsel %vm367, %v391, %v343
          %v416 = vsel %vm368, %v392, %v344
          %v417 = vsel %vm369, %v393, %v345
          %v418 = vsel %vm370, %v394, %v346
          %v419 = vsel %vm371, %v395, %v347
          %v420 = vsel %vm372, %v396, %v348
          %v421 = vsel %vm373, %v397, %v349
          %v422 = vsel %vm374, %v398, %v350
          %v423 = vsel %vm375, %v399, %v351
          %v424 = vsel %vm376, %v400, %v352
          %v425 = vsel %vm377, %v401, %v353
          %v426 = vsel %vm378, %v402, %v354
          %v427 = vsel %vm379, %v403, %v355
          %v428 = vsel %vm380, %v404, %v356
          %v429 = vsel %vm381, %v405, %v357
          %v430 = vpack.c.bf16 %v412, %v406
          %v431 = vpack.c.bf16 %v413, %v407
          %v432 = vpack.c.bf16 %v414, %v408
          %v433 = vpack.c.bf16 %v415, %v409
          %v434 = vpack.c.bf16 %v416, %v410
          %v435 = vpack.c.bf16 %v417, %v411
          %v436 = vpack.c.bf16 %v424, %v418
          %v437 = vpack.c.bf16 %v425, %v419
          %v438 = vpack.c.bf16 %v426, %v420
          %v439 = vpack.c.bf16 %v427, %v421
          %v440 = vpack.c.bf16 %v428, %v422
          %v441 = vpack.c.bf16 %v429, %v423
          %v442 = vld [vmem:[#allocation2] sm:$0xff]
          %v443 = vld [vmem:[#allocation2 + $0x8] sm:$0xff]
          %v444 = vld [vmem:[#allocation2 + $0x10] sm:$0xff]
          %v445 = vld [vmem:[#allocation2 + $0x18] sm:$0xff]
          %v446 = vld [vmem:[#allocation2 + $0x20] sm:$0xff]
          %v447 = vld [vmem:[#allocation2 + $0x28] sm:$0xff]
          %v448 = vld [vmem:[#allocation2 + $0x30] sm:$0xff]
          %v449 = vld [vmem:[#allocation2 + $0x38] sm:$0xff]
          %v450 = vld [vmem:[%s246] sm:$0xff]
          %v451 = vld [vmem:[%s246 + $0x8] sm:$0xff]
          %v452 = vld [vmem:[%s246 + $0x10] sm:$0xff]
          %v453 = vld [vmem:[%s246 + $0x18] sm:$0xff]
          %v454 = vld [vmem:[%s246 + $0x20] sm:$0xff]
          %v455 = vld [vmem:[%s246 + $0x28] sm:$0xff]
          %v456 = vld [vmem:[%s246 + $0x30] sm:$0xff]
          %v457 = vld [vmem:[%s246 + $0x38] sm:$0xff]
          %v458 = vld [vmem:[%s246 + $0x40] sm:$0xff]
          %v459 = vld [vmem:[%s246 + $0x48] sm:$0xff]
          %v460 = vld [vmem:[%s246 + $0x50] sm:$0xff]
          %v461 = vld [vmem:[%s246 + $0x58] sm:$0xff]
          %v462 = vld [vmem:[%s246 + $0x60] sm:$0xff]
          %v463 = vld [vmem:[%s246 + $0x68] sm:$0xff]
          %v464 = vld [vmem:[%s246 + $0x70] sm:$0xff]
          %v465 = vld [vmem:[%s246 + $0x78] sm:$0xff]
          %v466 = vld [vmem:[%s246 + $0x80] sm:$0xff]
          %v467 = vld [vmem:[%s246 + $0x88] sm:$0xff]
          %v468 = vld [vmem:[%s246 + $0x90] sm:$0xff]
          %v469 = vld [vmem:[%s246 + $0x98] sm:$0xff]
          %v470 = vld [vmem:[%s246 + $0xa0] sm:$0xff]
          %v471 = vld [vmem:[%s246 + $0xa8] sm:$0xff]
          %v472 = vld [vmem:[%s246 + $0xb0] sm:$0xff]
          %v473 = vld [vmem:[%s246 + $0xb8] sm:$0xff]
          %v474 = vld [vmem:[%s246 + $0xc0] sm:$0xff]
          %v475 = vld [vmem:[%s246 + $0xc8] sm:$0xff]
          %v476 = vld [vmem:[%s246 + $0xd0] sm:$0xff]
          %v477 = vld [vmem:[%s246 + $0xd8] sm:$0xff]
          %v478 = vld [vmem:[%s246 + $0xe0] sm:$0xff]
          %v479 = vld [vmem:[%s246 + $0xe8] sm:$0xff]
          %v480 = vld [vmem:[%s246 + $0xf0] sm:$0xff]
          %v481 = vld [vmem:[%s246 + $0xf8] sm:$0xff]
          %v482 = vld [vmem:[%s246 + $0x100] sm:$0xff]
          %v483 = vld [vmem:[%s246 + $0x108] sm:$0xff]
          %v484 = vld [vmem:[%s246 + $0x110] sm:$0xff]
          %v485 = vld [vmem:[%s246 + $0x118] sm:$0xff]
          %v486 = vld [vmem:[%s246 + $0x120] sm:$0xff]
          %v487 = vld [vmem:[%s246 + $0x128] sm:$0xff]
          %v488 = vld [vmem:[%s246 + $0x130] sm:$0xff]
          %v489 = vld [vmem:[%s246 + $0x138] sm:$0xff]
          %v490 = vld [vmem:[%s246 + $0x140] sm:$0xff]
          %v491 = vld [vmem:[%s246 + $0x148] sm:$0xff]
          %v492 = vld [vmem:[%s246 + $0x150] sm:$0xff]
          %v493 = vld [vmem:[%s246 + $0x158] sm:$0xff]
          %v494 = vld [vmem:[%s246 + $0x160] sm:$0xff]
          %v495 = vld [vmem:[%s246 + $0x168] sm:$0xff]
          %v496 = vld [vmem:[%s246 + $0x170] sm:$0xff]
          %v497 = vld [vmem:[%s246 + $0x178] sm:$0xff]
          %v498 = vld [vmem:[%s246 + $0x180] sm:$0xff]
          %v499 = vld [vmem:[%s246 + $0x188] sm:$0xff]
          %v500 = vld [vmem:[%s246 + $0x190] sm:$0xff]
          %v501 = vld [vmem:[%s246 + $0x198] sm:$0xff]
          %v502 = vld [vmem:[%s246 + $0x1a0] sm:$0xff]
          %v503 = vld [vmem:[%s246 + $0x1a8] sm:$0xff]
          %v504 = vld [vmem:[%s246 + $0x1b0] sm:$0xff]
          %v505 = vld [vmem:[%s246 + $0x1b8] sm:$0xff]
          %v506 = vld [vmem:[%s246 + $0x1c0] sm:$0xff]
          %v507 = vld [vmem:[%s246 + $0x1c8] sm:$0xff]
          %v508 = vld [vmem:[%s246 + $0x1d0] sm:$0xff]
          %v509 = vld [vmem:[%s246 + $0x1d8] sm:$0xff]
          %v510 = vld [vmem:[%s246 + $0x1e0] sm:$0xff]
          %v511 = vld [vmem:[%s246 + $0x1e8] sm:$0xff]
          %v512 = vld [vmem:[%s246 + $0x1f0] sm:$0xff]
          %v513 = vld [vmem:[%s246 + $0x1f8] sm:$0xff]
          %v514 = vld [vmem:[%s246 + $0x200] sm:$0xff]
          %v515 = vld [vmem:[%s246 + $0x208] sm:$0xff]
          %v516 = vld [vmem:[%s246 + $0x210] sm:$0xff]
          %v517 = vld [vmem:[%s246 + $0x218] sm:$0xff]
          %v518 = vld [vmem:[%s246 + $0x220] sm:$0xff]
          %v519 = vld [vmem:[%s246 + $0x228] sm:$0xff]
          %v520 = vld [vmem:[%s246 + $0x230] sm:$0xff]
          %v521 = vld [vmem:[%s246 + $0x238] sm:$0xff]
          %v522 = vld [vmem:[%s246 + $0x240] sm:$0xff]
          %v523 = vld [vmem:[%s246 + $0x248] sm:$0xff]
          %v524 = vld [vmem:[%s246 + $0x250] sm:$0xff]
          %v525 = vld [vmem:[%s246 + $0x258] sm:$0xff]
          %v526 = vld [vmem:[%s246 + $0x260] sm:$0xff]
          %v527 = vld [vmem:[%s246 + $0x268] sm:$0xff]
          %v528 = vld [vmem:[%s246 + $0x270] sm:$0xff]
          %v529 = vld [vmem:[%s246 + $0x278] sm:$0xff]
          %v530 = vld [vmem:[%s246 + $0x280] sm:$0xff]
          %v531 = vld [vmem:[%s246 + $0x288] sm:$0xff]
          %v532 = vld [vmem:[%s246 + $0x290] sm:$0xff]
          %v533 = vld [vmem:[%s246 + $0x298] sm:$0xff]
          %v534 = vld [vmem:[%s246 + $0x2a0] sm:$0xff]
          %v535 = vld [vmem:[%s246 + $0x2a8] sm:$0xff]
          %v536 = vld [vmem:[%s246 + $0x2b0] sm:$0xff]
          %v537 = vld [vmem:[%s246 + $0x2b8] sm:$0xff]
          %v538 = vld [vmem:[%s246 + $0x2c0] sm:$0xff]
          %v539 = vld [vmem:[%s246 + $0x2c8] sm:$0xff]
          %v540 = vld [vmem:[%s246 + $0x2d0] sm:$0xff]
          %v541 = vld [vmem:[%s246 + $0x2d8] sm:$0xff]
          %v542 = vld [vmem:[%s246 + $0x2e0] sm:$0xff]
          %v543 = vld [vmem:[%s246 + $0x2e8] sm:$0xff]
          %v544 = vld [vmem:[%s246 + $0x2f0] sm:$0xff]
          %v545 = vld [vmem:[%s246 + $0x2f8] sm:$0xff]
          %v642 = vunpack.c.l.b16 %v450
          %v643 = vunpack.c.h.b16 %v450
          %v644 = vunpack.c.l.b16 %v451
          %v645 = vunpack.c.h.b16 %v451
          %v646 = vunpack.c.l.b16 %v452
          %v647 = vunpack.c.h.b16 %v452
          %v648 = vunpack.c.l.b16 %v453
          %v649 = vunpack.c.h.b16 %v453
          %v650 = vunpack.c.l.b16 %v454
          %v651 = vunpack.c.h.b16 %v454
          %v652 = vunpack.c.l.b16 %v455
          %v653 = vunpack.c.h.b16 %v455
          %v654 = vunpack.c.l.b16 %v456
          %v655 = vunpack.c.h.b16 %v456
          %v656 = vunpack.c.l.b16 %v457
          %v657 = vunpack.c.h.b16 %v457
          %v658 = vunpack.c.l.b16 %v458
          %v659 = vunpack.c.h.b16 %v458
          %v660 = vunpack.c.l.b16 %v459
          %v661 = vunpack.c.h.b16 %v459
          %v662 = vunpack.c.l.b16 %v460
          %v663 = vunpack.c.h.b16 %v460
          %v664 = vunpack.c.l.b16 %v461
          %v665 = vunpack.c.h.b16 %v461
          %v666 = vunpack.c.l.b16 %v462
          %v667 = vunpack.c.h.b16 %v462
          %v668 = vunpack.c.l.b16 %v463
          %v669 = vunpack.c.h.b16 %v463
          %v670 = vunpack.c.l.b16 %v464
          %v671 = vunpack.c.h.b16 %v464
          %v672 = vunpack.c.l.b16 %v465
          %v673 = vunpack.c.h.b16 %v465
          %v674 = vunpack.c.l.b16 %v466
          %v675 = vunpack.c.h.b16 %v466
          %v676 = vunpack.c.l.b16 %v467
          %v677 = vunpack.c.h.b16 %v467
          %v678 = vunpack.c.l.b16 %v468
          %v679 = vunpack.c.h.b16 %v468
          %v680 = vunpack.c.l.b16 %v469
          %v681 = vunpack.c.h.b16 %v469
          %v682 = vunpack.c.l.b16 %v470
          %v683 = vunpack.c.h.b16 %v470
          %v684 = vunpack.c.l.b16 %v471
          %v685 = vunpack.c.h.b16 %v471
          %v686 = vunpack.c.l.b16 %v472
          %v687 = vunpack.c.h.b16 %v472
          %v688 = vunpack.c.l.b16 %v473
          %v689 = vunpack.c.h.b16 %v473
          %v690 = vunpack.c.l.b16 %v474
          %v691 = vunpack.c.h.b16 %v474
          %v692 = vunpack.c.l.b16 %v475
          %v693 = vunpack.c.h.b16 %v475
          %v694 = vunpack.c.l.b16 %v476
          %v695 = vunpack.c.h.b16 %v476
          %v696 = vunpack.c.l.b16 %v477
          %v697 = vunpack.c.h.b16 %v477
          %v698 = vunpack.c.l.b16 %v478
          %v699 = vunpack.c.h.b16 %v478
          %v700 = vunpack.c.l.b16 %v479
          %v701 = vunpack.c.h.b16 %v479
          %v702 = vunpack.c.l.b16 %v480
          %v703 = vunpack.c.h.b16 %v480
          %v704 = vunpack.c.l.b16 %v481
          %v705 = vunpack.c.h.b16 %v481
          %v706 = vunpack.c.l.b16 %v482
          %v707 = vunpack.c.h.b16 %v482
          %v708 = vunpack.c.l.b16 %v483
          %v709 = vunpack.c.h.b16 %v483
          %v710 = vunpack.c.l.b16 %v484
          %v711 = vunpack.c.h.b16 %v484
          %v712 = vunpack.c.l.b16 %v485
          %v713 = vunpack.c.h.b16 %v485
          %v714 = vunpack.c.l.b16 %v486
          %v715 = vunpack.c.h.b16 %v486
          %v716 = vunpack.c.l.b16 %v487
          %v717 = vunpack.c.h.b16 %v487
          %v718 = vunpack.c.l.b16 %v488
          %v719 = vunpack.c.h.b16 %v488
          %v720 = vunpack.c.l.b16 %v489
          %v721 = vunpack.c.h.b16 %v489
          %v722 = vunpack.c.l.b16 %v490
          %v723 = vunpack.c.h.b16 %v490
          %v724 = vunpack.c.l.b16 %v491
          %v725 = vunpack.c.h.b16 %v491
          %v726 = vunpack.c.l.b16 %v492
          %v727 = vunpack.c.h.b16 %v492
          %v728 = vunpack.c.l.b16 %v493
          %v729 = vunpack.c.h.b16 %v493
          %v730 = vunpack.c.l.b16 %v494
          %v731 = vunpack.c.h.b16 %v494
          %v732 = vunpack.c.l.b16 %v495
          %v733 = vunpack.c.h.b16 %v495
          %v734 = vunpack.c.l.b16 %v496
          %v735 = vunpack.c.h.b16 %v496
          %v736 = vunpack.c.l.b16 %v497
          %v737 = vunpack.c.h.b16 %v497
          %v738 = vunpack.c.l.b16 %v498
          %v739 = vunpack.c.h.b16 %v498
          %v740 = vunpack.c.l.b16 %v499
          %v741 = vunpack.c.h.b16 %v499
          %v742 = vunpack.c.l.b16 %v500
          %v743 = vunpack.c.h.b16 %v500
          %v744 = vunpack.c.l.b16 %v501
          %v745 = vunpack.c.h.b16 %v501
          %v746 = vunpack.c.l.b16 %v502
          %v747 = vunpack.c.h.b16 %v502
          %v748 = vunpack.c.l.b16 %v503
          %v749 = vunpack.c.h.b16 %v503
          %v750 = vunpack.c.l.b16 %v504
          %v751 = vunpack.c.h.b16 %v504
          %v752 = vunpack.c.l.b16 %v505
          %v753 = vunpack.c.h.b16 %v505
          %v754 = vunpack.c.l.b16 %v506
          %v755 = vunpack.c.h.b16 %v506
          %v756 = vunpack.c.l.b16 %v507
          %v757 = vunpack.c.h.b16 %v507
          %v758 = vunpack.c.l.b16 %v508
          %v759 = vunpack.c.h.b16 %v508
          %v760 = vunpack.c.l.b16 %v509
          %v761 = vunpack.c.h.b16 %v509
          %v762 = vunpack.c.l.b16 %v510
          %v763 = vunpack.c.h.b16 %v510
          %v764 = vunpack.c.l.b16 %v511
          %v765 = vunpack.c.h.b16 %v511
          %v766 = vunpack.c.l.b16 %v512
          %v767 = vunpack.c.h.b16 %v512
          %v768 = vunpack.c.l.b16 %v513
          %v769 = vunpack.c.h.b16 %v513
          %v770 = vunpack.c.l.b16 %v514
          %v771 = vunpack.c.h.b16 %v514
          %v772 = vunpack.c.l.b16 %v515
          %v773 = vunpack.c.h.b16 %v515
          %v774 = vunpack.c.l.b16 %v516
          %v775 = vunpack.c.h.b16 %v516
          %v776 = vunpack.c.l.b16 %v517
          %v777 = vunpack.c.h.b16 %v517
          %v778 = vunpack.c.l.b16 %v518
          %v779 = vunpack.c.h.b16 %v518
          %v780 = vunpack.c.l.b16 %v519
          %v781 = vunpack.c.h.b16 %v519
          %v782 = vunpack.c.l.b16 %v520
          %v783 = vunpack.c.h.b16 %v520
          %v784 = vunpack.c.l.b16 %v521
          %v785 = vunpack.c.h.b16 %v521
          %v786 = vunpack.c.l.b16 %v522
          %v787 = vunpack.c.h.b16 %v522
          %v788 = vunpack.c.l.b16 %v523
          %v789 = vunpack.c.h.b16 %v523
          %v790 = vunpack.c.l.b16 %v524
          %v791 = vunpack.c.h.b16 %v524
          %v792 = vunpack.c.l.b16 %v525
          %v793 = vunpack.c.h.b16 %v525
          %v794 = vunpack.c.l.b16 %v526
          %v795 = vunpack.c.h.b16 %v526
          %v796 = vunpack.c.l.b16 %v527
          %v797 = vunpack.c.h.b16 %v527
          %v798 = vunpack.c.l.b16 %v528
          %v799 = vunpack.c.h.b16 %v528
          %v800 = vunpack.c.l.b16 %v529
          %v801 = vunpack.c.h.b16 %v529
          %v802 = vunpack.c.l.b16 %v530
          %v803 = vunpack.c.h.b16 %v530
          %v804 = vunpack.c.l.b16 %v531
          %v805 = vunpack.c.h.b16 %v531
          %v806 = vunpack.c.l.b16 %v532
          %v807 = vunpack.c.h.b16 %v532
          %v808 = vunpack.c.l.b16 %v533
          %v809 = vunpack.c.h.b16 %v533
          %v810 = vunpack.c.l.b16 %v534
          %v811 = vunpack.c.h.b16 %v534
          %v812 = vunpack.c.l.b16 %v535
          %v813 = vunpack.c.h.b16 %v535
          %v814 = vunpack.c.l.b16 %v536
          %v815 = vunpack.c.h.b16 %v536
          %v816 = vunpack.c.l.b16 %v537
          %v817 = vunpack.c.h.b16 %v537
          %v818 = vunpack.c.l.b16 %v538
          %v819 = vunpack.c.h.b16 %v538
          %v820 = vunpack.c.l.b16 %v539
          %v821 = vunpack.c.h.b16 %v539
          %v822 = vunpack.c.l.b16 %v540
          %v823 = vunpack.c.h.b16 %v540
          %v824 = vunpack.c.l.b16 %v541
          %v825 = vunpack.c.h.b16 %v541
          %v826 = vunpack.c.l.b16 %v542
          %v827 = vunpack.c.h.b16 %v542
          %v828 = vunpack.c.l.b16 %v543
          %v829 = vunpack.c.h.b16 %v543
          %v830 = vunpack.c.l.b16 %v544
          %v831 = vunpack.c.h.b16 %v544
          %v832 = vunpack.c.l.b16 %v545
          %v833 = vunpack.c.h.b16 %v545
          %v834 = vpack.c.b16 %v644, %v642
          %v835 = vpack.c.b16 %v645, %v643
          %v836 = vpack.c.b16 %v648, %v646
          %v837 = vpack.c.b16 %v649, %v647
          %v838 = vpack.c.b16 %v652, %v650
          %v839 = vpack.c.b16 %v653, %v651
          %v840 = vpack.c.b16 %v656, %v654
          %v841 = vpack.c.b16 %v657, %v655
          %v842 = vpack.c.b16 %v660, %v658
          %v843 = vpack.c.b16 %v661, %v659
          %v844 = vpack.c.b16 %v664, %v662
          %v845 = vpack.c.b16 %v665, %v663
          %v846 = vpack.c.b16 %v668, %v666
          %v847 = vpack.c.b16 %v669, %v667
          %v848 = vpack.c.b16 %v672, %v670
          %v849 = vpack.c.b16 %v673, %v671
          %v850 = vpack.c.b16 %v676, %v674
          %v851 = vpack.c.b16 %v677, %v675
          %v852 = vpack.c.b16 %v680, %v678
          %v853 = vpack.c.b16 %v681, %v679
          %v854 = vpack.c.b16 %v684, %v682
          %v855 = vpack.c.b16 %v685, %v683
          %v856 = vpack.c.b16 %v688, %v686
          %v857 = vpack.c.b16 %v689, %v687
          %v858 = vpack.c.b16 %v692, %v690
          %v859 = vpack.c.b16 %v693, %v691
          %v860 = vpack.c.b16 %v696, %v694
          %v861 = vpack.c.b16 %v697, %v695
          %v862 = vpack.c.b16 %v700, %v698
          %v863 = vpack.c.b16 %v701, %v699
          %v864 = vpack.c.b16 %v704, %v702
          %v865 = vpack.c.b16 %v705, %v703
          %v866 = vpack.c.b16 %v708, %v706
          %v867 = vpack.c.b16 %v709, %v707
          %v868 = vpack.c.b16 %v712, %v710
          %v869 = vpack.c.b16 %v713, %v711
          %v870 = vpack.c.b16 %v716, %v714
          %v871 = vpack.c.b16 %v717, %v715
          %v872 = vpack.c.b16 %v720, %v718
          %v873 = vpack.c.b16 %v721, %v719
          %v874 = vpack.c.b16 %v724, %v722
          %v875 = vpack.c.b16 %v725, %v723
          %v876 = vpack.c.b16 %v728, %v726
          %v877 = vpack.c.b16 %v729, %v727
          %v878 = vpack.c.b16 %v732, %v730
          %v879 = vpack.c.b16 %v733, %v731
          %v880 = vpack.c.b16 %v736, %v734
          %v881 = vpack.c.b16 %v737, %v735
          %v882 = vpack.c.b16 %v740, %v738
          %v883 = vpack.c.b16 %v741, %v739
          %v884 = vpack.c.b16 %v744, %v742
          %v885 = vpack.c.b16 %v745, %v743
          %v886 = vpack.c.b16 %v748, %v746
          %v887 = vpack.c.b16 %v749, %v747
          %v888 = vpack.c.b16 %v752, %v750
          %v889 = vpack.c.b16 %v753, %v751
          %v890 = vpack.c.b16 %v756, %v754
          %v891 = vpack.c.b16 %v757, %v755
          %v892 = vpack.c.b16 %v760, %v758
          %v893 = vpack.c.b16 %v761, %v759
          %v894 = vpack.c.b16 %v764, %v762
          %v895 = vpack.c.b16 %v765, %v763
          %v896 = vpack.c.b16 %v768, %v766
          %v897 = vpack.c.b16 %v769, %v767
          %v898 = vpack.c.b16 %v772, %v770
          %v899 = vpack.c.b16 %v773, %v771
          %v900 = vpack.c.b16 %v776, %v774
          %v901 = vpack.c.b16 %v777, %v775
          %v902 = vpack.c.b16 %v780, %v778
          %v903 = vpack.c.b16 %v781, %v779
          %v904 = vpack.c.b16 %v784, %v782
          %v905 = vpack.c.b16 %v785, %v783
          %v906 = vpack.c.b16 %v788, %v786
          %v907 = vpack.c.b16 %v789, %v787
          %v908 = vpack.c.b16 %v792, %v790
          %v909 = vpack.c.b16 %v793, %v791
          %v910 = vpack.c.b16 %v796, %v794
          %v911 = vpack.c.b16 %v797, %v795
          %v912 = vpack.c.b16 %v800, %v798
          %v913 = vpack.c.b16 %v801, %v799
          %v914 = vpack.c.b16 %v804, %v802
          %v915 = vpack.c.b16 %v805, %v803
          %v916 = vpack.c.b16 %v808, %v806
          %v917 = vpack.c.b16 %v809, %v807
          %v918 = vpack.c.b16 %v812, %v810
          %v919 = vpack.c.b16 %v813, %v811
          %v920 = vpack.c.b16 %v816, %v814
          %v921 = vpack.c.b16 %v817, %v815
          %v922 = vpack.c.b16 %v820, %v818
          %v923 = vpack.c.b16 %v821, %v819
          %v924 = vpack.c.b16 %v824, %v822
          %v925 = vpack.c.b16 %v825, %v823
          %v926 = vpack.c.b16 %v828, %v826
          %v927 = vpack.c.b16 %v829, %v827
          %v928 = vpack.c.b16 %v832, %v830
          %v929 = vpack.c.b16 %v833, %v831
          %1026 = vmatprep.subr.bf16.mxu0 %v835
          %1027 = vmatpush1.bf16.msra.mxu0 %v834
          %1028 = vmatprep.subr.bf16.mxu0 %v837
          %1029 = vmatpush1.bf16.msra.mxu0 %v836
          %1030 = vmatprep.subr.bf16.mxu0 %v839
          %1031 = vmatpush1.bf16.msra.mxu0 %v838
          %1032 = vmatprep.subr.bf16.mxu0 %v841
          %1033 = vmatpush1.bf16.msra.mxu0 %v840
          %1034 = vmatprep.subr.bf16.mxu0 %v843
          %1035 = vmatpush1.bf16.msra.mxu0 %v842
          %1036 = vmatprep.subr.bf16.mxu0 %v845
          %1037 = vmatpush1.bf16.msra.mxu0 %v844
          %1038 = vmatprep.subr.bf16.mxu0 %v847
          %1039 = vmatpush1.bf16.msra.mxu0 %v846
          %1040 = vmatprep.subr.bf16.mxu0 %v849
          %1041 = vmatpush1.bf16.msra.mxu0 %v848
          %1042 = vmatprep.subr.bf16.mxu0 %v851
          %1043 = vmatpush1.bf16.msra.mxu0 %v850
          %1044 = vmatprep.subr.bf16.mxu0 %v853
          %1045 = vmatpush1.bf16.msra.mxu0 %v852
          %1046 = vmatprep.subr.bf16.mxu0 %v855
          %1047 = vmatpush1.bf16.msra.mxu0 %v854
          %1048 = vmatprep.subr.bf16.mxu0 %v857
          %1049 = vmatpush1.bf16.msra.mxu0 %v856
          %1050 = vmatprep.subr.bf16.mxu0 %v859
          %1051 = vmatpush1.bf16.msra.mxu0 %v858
          %1052 = vmatprep.subr.bf16.mxu0 %v861
          %1053 = vmatpush1.bf16.msra.mxu0 %v860
          %1054 = vmatprep.subr.bf16.mxu0 %v863
          %1055 = vmatpush1.bf16.msra.mxu0 %v862
          %1056 = vmatprep.subr.bf16.mxu0 %v865
          %1057 = vmatpush1.bf16.msra.mxu0 %v864
          %1058 = vmatprep.mubr.bf16.mxu0 %v431
          %1059 = vmatmul.mubr.bf16.gmra.mrb[0].mxu0 %v430
          %v1060 = vpop.f32.mrb[0].mxu0
          %v1061 = vadd.f32 0.0, %v1060
          %v1062 = vpop.f32.mrb[0].mxu0
          %v1063 = vadd.f32 0.0, %v1062
          %v1064 = vpop.f32.mrb[0].mxu0
          %v1065 = vadd.f32 0.0, %v1064
          %v1066 = vpop.f32.mrb[0].mxu0
          %v1067 = vadd.f32 0.0, %v1066
          %1068 = vmatprep.mubr.bf16.mxu0 %v437
          %1069 = vmatmul.mubr.bf16.gmra.mrb[0].mxu0 %v436
          %v1070 = vpop.f32.mrb[0].mxu0
          %v1071 = vadd.f32 0.0, %v1070
          %v1072 = vpop.f32.mrb[0].mxu0
          %v1073 = vadd.f32 0.0, %v1072
          %v1074 = vpop.f32.mrb[0].mxu0
          %v1075 = vadd.f32 0.0, %v1074
          %v1076 = vpop.f32.mrb[0].mxu0
          %v1077 = vadd.f32 0.0, %v1076
          %1078 = vdwg.mxu0
          %1079 = vmatprep.subr.bf16.mxu0 %v867
          %1080 = vmatpush1.bf16.msra.mxu0 %v866
          %1081 = vmatprep.subr.bf16.mxu0 %v869
          %1082 = vmatpush1.bf16.msra.mxu0 %v868
          %1083 = vmatprep.subr.bf16.mxu0 %v871
          %1084 = vmatpush1.bf16.msra.mxu0 %v870
          %1085 = vmatprep.subr.bf16.mxu0 %v873
          %1086 = vmatpush1.bf16.msra.mxu0 %v872
          %1087 = vmatprep.subr.bf16.mxu0 %v875
          %1088 = vmatpush1.bf16.msra.mxu0 %v874
          %1089 = vmatprep.subr.bf16.mxu0 %v877
          %1090 = vmatpush1.bf16.msra.mxu0 %v876
          %1091 = vmatprep.subr.bf16.mxu0 %v879
          %1092 = vmatpush1.bf16.msra.mxu0 %v878
          %1093 = vmatprep.subr.bf16.mxu0 %v881
          %1094 = vmatpush1.bf16.msra.mxu0 %v880
          %1095 = vmatprep.subr.bf16.mxu0 %v883
          %1096 = vmatpush1.bf16.msra.mxu0 %v882
          %1097 = vmatprep.subr.bf16.mxu0 %v885
          %1098 = vmatpush1.bf16.msra.mxu0 %v884
          %1099 = vmatprep.subr.bf16.mxu0 %v887
          %1100 = vmatpush1.bf16.msra.mxu0 %v886
          %1101 = vmatprep.subr.bf16.mxu0 %v889
          %1102 = vmatpush1.bf16.msra.mxu0 %v888
          %1103 = vmatprep.subr.bf16.mxu0 %v891
          %1104 = vmatpush1.bf16.msra.mxu0 %v890
          %1105 = vmatprep.subr.bf16.mxu0 %v893
          %1106 = vmatpush1.bf16.msra.mxu0 %v892
          %1107 = vmatprep.subr.bf16.mxu0 %v895
          %1108 = vmatpush1.bf16.msra.mxu0 %v894
          %1109 = vmatprep.subr.bf16.mxu0 %v897
          %1110 = vmatpush1.bf16.msra.mxu0 %v896
          %1111 = vmatprep.mubr.bf16.mxu0 %v433
          %1112 = vmatmul.mubr.bf16.gmra.mrb[0].mxu0 %v432
          %v1113 = vpop.f32.mrb[0].mxu0
          %v1114 = vadd.f32 %v1061, %v1113
          %v1115 = vpop.f32.mrb[0].mxu0
          %v1116 = vadd.f32 %v1063, %v1115
          %v1117 = vpop.f32.mrb[0].mxu0
          %v1118 = vadd.f32 %v1065, %v1117
          %v1119 = vpop.f32.mrb[0].mxu0
          %v1120 = vadd.f32 %v1067, %v1119
          %1121 = vmatprep.mubr.bf16.mxu0 %v439
          %1122 = vmatmul.mubr.bf16.gmra.mrb[0].mxu0 %v438
          %v1123 = vpop.f32.mrb[0].mxu0
          %v1124 = vadd.f32 %v1071, %v1123
          %v1125 = vpop.f32.mrb[0].mxu0
          %v1126 = vadd.f32 %v1073, %v1125
          %v1127 = vpop.f32.mrb[0].mxu0
          %v1128 = vadd.f32 %v1075, %v1127
          %v1129 = vpop.f32.mrb[0].mxu0
          %v1130 = vadd.f32 %v1077, %v1129
          %1131 = vdwg.mxu0
          %1132 = vmatprep.subr.bf16.mxu0 %v899
          %1133 = vmatpush1.bf16.msra.mxu0 %v898
          %1134 = vmatprep.subr.bf16.mxu0 %v901
          %1135 = vmatpush1.bf16.msra.mxu0 %v900
          %1136 = vmatprep.subr.bf16.mxu0 %v903
          %1137 = vmatpush1.bf16.msra.mxu0 %v902
          %1138 = vmatprep.subr.bf16.mxu0 %v905
          %1139 = vmatpush1.bf16.msra.mxu0 %v904
          %1140 = vmatprep.subr.bf16.mxu0 %v907
          %1141 = vmatpush1.bf16.msra.mxu0 %v906
          %1142 = vmatprep.subr.bf16.mxu0 %v909
          %1143 = vmatpush1.bf16.msra.mxu0 %v908
          %1144 = vmatprep.subr.bf16.mxu0 %v911
          %1145 = vmatpush1.bf16.msra.mxu0 %v910
          %1146 = vmatprep.subr.bf16.mxu0 %v913
          %1147 = vmatpush1.bf16.msra.mxu0 %v912
          %1148 = vmatprep.subr.bf16.mxu0 %v915
          %1149 = vmatpush1.bf16.msra.mxu0 %v914
          %1150 = vmatprep.subr.bf16.mxu0 %v917
          %1151 = vmatpush1.bf16.msra.mxu0 %v916
          %1152 = vmatprep.subr.bf16.mxu0 %v919
          %1153 = vmatpush1.bf16.msra.mxu0 %v918
          %1154 = vmatprep.subr.bf16.mxu0 %v921
          %1155 = vmatpush1.bf16.msra.mxu0 %v920
          %1156 = vmatprep.subr.bf16.mxu0 %v923
          %1157 = vmatpush1.bf16.msra.mxu0 %v922
          %1158 = vmatprep.subr.bf16.mxu0 %v925
          %1159 = vmatpush1.bf16.msra.mxu0 %v924
          %1160 = vmatprep.subr.bf16.mxu0 %v927
          %1161 = vmatpush1.bf16.msra.mxu0 %v926
          %1162 = vmatprep.subr.bf16.mxu0 %v929
          %1163 = vmatpush1.bf16.msra.mxu0 %v928
          %1164 = vmatprep.mubr.bf16.mxu0 %v435
          %1165 = vmatmul.mubr.bf16.gmra.mrb[0].mxu0 %v434
          %v1166 = vpop.f32.mrb[0].mxu0
          %v1167 = vadd.f32 %v1114, %v1166
          %v1168 = vpop.f32.mrb[0].mxu0
          %v1169 = vadd.f32 %v1116, %v1168
          %v1170 = vpop.f32.mrb[0].mxu0
          %v1171 = vadd.f32 %v1118, %v1170
          %v1172 = vpop.f32.mrb[0].mxu0
          %v1173 = vadd.f32 %v1120, %v1172
          %1174 = vmatprep.mubr.bf16.mxu0 %v441
          %1175 = vmatmul.mubr.bf16.gmra.mrb[0].mxu0 %v440
          %v1176 = vpop.f32.mrb[0].mxu0
          %v1177 = vadd.f32 %v1124, %v1176
          %v1178 = vpop.f32.mrb[0].mxu0
          %v1179 = vadd.f32 %v1126, %v1178
          %v1180 = vpop.f32.mrb[0].mxu0
          %v1181 = vadd.f32 %v1128, %v1180
          %v1182 = vpop.f32.mrb[0].mxu0
          %v1183 = vadd.f32 %v1130, %v1182
          %1184 = vdwg.mxu0
          %v1185 = vadd.f32 %v442, %v1167
          %v1186 = vadd.f32 %v443, %v1169
          %v1187 = vadd.f32 %v444, %v1171
          %v1188 = vadd.f32 %v445, %v1173
          %v1189 = vadd.f32 %v446, %v1177
          %v1190 = vadd.f32 %v447, %v1179
          %v1191 = vadd.f32 %v448, %v1181
          %v1192 = vadd.f32 %v449, %v1183
          %1193 = vst [vmem:[#allocation2] sm:$0xff] %v1185
          %1194 = vst [vmem:[#allocation2 + $0x8] sm:$0xff] %v1186
          %1195 = vst [vmem:[#allocation2 + $0x10] sm:$0xff] %v1187
          %1196 = vst [vmem:[#allocation2 + $0x18] sm:$0xff] %v1188
          %1197 = vst [vmem:[#allocation2 + $0x20] sm:$0xff] %v1189
          %1198 = vst [vmem:[#allocation2 + $0x28] sm:$0xff] %v1190
          %1199 = vst [vmem:[#allocation2 + $0x30] sm:$0xff] %v1191
          %1200 = vst [vmem:[#allocation2 + $0x38] sm:$0xff] %v1192
        $region44: #{tpu_custom_call.1} parent=27 // pred_fallthru
          _
        %p1201 = scmp.eq.s32.totalorder %s34, 1
        // Predicated region
        $region45: #{tpu_custom_call.1} parent=27 // pred_check
          %p1202 = pneg %p1201
        $region46: #{tpu_custom_call.1} parent=27 // pred_check_branch
          %1204 = sbr.rel (%p1202) target = $region48
        $region47: #{tpu_custom_call.1} parent=27 // pred_region
          %v1205 = vld [vmem:[#allocation2] sm:$0xff]
          %v1206 = vld [vmem:[#allocation2 + $0x8] sm:$0xff]
          %v1207 = vld [vmem:[#allocation2 + $0x10] sm:$0xff]
          %v1208 = vld [vmem:[#allocation2 + $0x18] sm:$0xff]
          %v1209 = vld [vmem:[#allocation2 + $0x20] sm:$0xff]
          %v1210 = vld [vmem:[#allocation2 + $0x28] sm:$0xff]
          %v1211 = vld [vmem:[#allocation2 + $0x30] sm:$0xff]
          %v1212 = vld [vmem:[#allocation2 + $0x38] sm:$0xff]
          %v1213 = vmax.f32 %v1205, 0.0
          %v1214 = vmax.f32 %v1206, 0.0
          %v1215 = vmax.f32 %v1207, 0.0
          %v1216 = vmax.f32 %v1208, 0.0
          %v1217 = vmax.f32 %v1209, 0.0
          %v1218 = vmax.f32 %v1210, 0.0
          %v1219 = vmax.f32 %v1211, 0.0
          %v1220 = vmax.f32 %v1212, 0.0
          %v1221 = vmin.f32 %v1213, 255.0
          %v1222 = vmin.f32 %v1214, 255.0
          %v1223 = vmin.f32 %v1215, 255.0
          %v1224 = vmin.f32 %v1216, 255.0
          %v1225 = vmin.f32 %v1217, 255.0
          %v1226 = vmin.f32 %v1218, 255.0
          %v1227 = vmin.f32 %v1219, 255.0
          %v1228 = vmin.f32 %v1220, 255.0
          %v1229 = vcvt.f32.s32.to.zero.pseudo %v1221
          %v1230 = vcvt.f32.s32.to.zero.pseudo %v1222
          %v1231 = vcvt.f32.s32.to.zero.pseudo %v1223
          %v1232 = vcvt.f32.s32.to.zero.pseudo %v1224
          %v1233 = vcvt.f32.s32.to.zero.pseudo %v1225
          %v1234 = vcvt.f32.s32.to.zero.pseudo %v1226
          %v1235 = vcvt.f32.s32.to.zero.pseudo %v1227
          %v1236 = vcvt.f32.s32.to.zero.pseudo %v1228
          %vm1237 = vcmp.gt.s32.totalorder %v1229, 127
          %vm1238 = vcmp.gt.s32.totalorder %v1230, 127
          %vm1239 = vcmp.gt.s32.totalorder %v1231, 127
          %vm1240 = vcmp.gt.s32.totalorder %v1232, 127
          %vm1241 = vcmp.gt.s32.totalorder %v1233, 127
          %vm1242 = vcmp.gt.s32.totalorder %v1234, 127
          %vm1243 = vcmp.gt.s32.totalorder %v1235, 127
          %vm1244 = vcmp.gt.s32.totalorder %v1236, 127
          %v1245 = vsub.s32 %v1229, 256
          %v1246 = vsub.s32 %v1230, 256
          %v1247 = vsub.s32 %v1231, 256
          %v1248 = vsub.s32 %v1232, 256
          %v1249 = vsub.s32 %v1233, 256
          %v1250 = vsub.s32 %v1234, 256
          %v1251 = vsub.s32 %v1235, 256
          %v1252 = vsub.s32 %v1236, 256
          %v1253 = vsel %vm1237, %v1245, %v1229
          %v1254 = vsel %vm1238, %v1246, %v1230
          %v1255 = vsel %vm1239, %v1247, %v1231
          %v1256 = vsel %vm1240, %v1248, %v1232
          %v1257 = vsel %vm1241, %v1249, %v1233
          %v1258 = vsel %vm1242, %v1250, %v1234
          %v1259 = vsel %vm1243, %v1251, %v1235
          %v1260 = vsel %vm1244, %v1252, %v1236
          %v1261 = vpack.c.b16 %v1255, %v1253
          %v1262 = vpack.c.b16 %v1259, %v1257
          %v1263 = vpack.c.b8 %v1262, %v1261
          %v1264 = vpack.c.b16 %v1256, %v1254
          %v1265 = vpack.c.b16 %v1260, %v1258
          %v1266 = vpack.c.b8 %v1265, %v1264
          %1267 = vst [vmem:[#allocation11] sm:$0xff] %v1263
          %1268 = vst [vmem:[#allocation11 + $0x8] sm:$0xff] %v1266
        $region48: #{tpu_custom_call.1} parent=27 // pred_fallthru
          _
        // Predicated region
        $region49: #{tpu_custom_call.1} parent=27 // pred_check
          %p1269 = pneg %p145
        $region50: #{tpu_custom_call.1} parent=27 // pred_check_branch
          %1271 = sbr.rel (%p1269) target = $region52
        $region51: #{tpu_custom_call.1} parent=27 // pred_region
          %s1272 = smul.u32 2, %s33
          %s1274 = ssub.s32 256, 256
          %1275 = vsyncadd [#allocation8], %s1274
          %s1276 = smul.addr %s1272, 128
          %s1277 = scalar_lea.hbm %s4, %s1276
          %s1279 = sshll.u32 [#allocation11], 4
          %s1280 = int_to_ptr.vmem [resolvable:$true] %s1279
          %1282 = dma.vmem_to_hbm [thread:$0]  %s1280, 256, %s1277, [#allocation8]
        $region52: #{tpu_custom_call.1} parent=27 // pred_fallthru
          _
        // Predicated region
        $region53: #{tpu_custom_call.1} parent=27 // pred_check
          %p1283 = pneg %p145
        $region54: #{tpu_custom_call.1} parent=27 // pred_check_branch
          %1285 = sbr.rel (%p1283) target = $region56
        $region55: #{tpu_custom_call.1} parent=27 // pred_region
          %1286 = dma.done [#allocation8], 256
        $region56: #{tpu_custom_call.1} parent=27 // pred_fallthru
          _
      $region28: #{tpu_custom_call.1} parent=5 // pred_fallthru
        _
      %p1287 = scmp.le.s32.totalorder 2, %s24
      // Predicated region
      $region57: #{tpu_custom_call.1} parent=5 // pred_check
        %p1288 = pneg %p1287
      $region58: #{tpu_custom_call.1} parent=5 // pred_check_branch
        %1290 = sbr.rel (%p1288) target = $region60
      $region59: #{tpu_custom_call.1} parent=5 // pred_region
        %s1291 = ssub.s32 %s24, 2
      $region60: #{tpu_custom_call.1} parent=5 // pred_fallthru
        _
    $region6: #{tpu_custom_call.1} parent=1 // loop_footer
      %s28 = sadd.s32 1, %s24
    $region7: #{tpu_custom_call.1} parent=1 // loop_footer_branch
      %23 = sbr.rel target = $region3
    $region8: #{tpu_custom_call.1} parent=1 // loop_exit
      _
    %1292 = vsyncpa [#allocation7], 1
    %s1293 = scalar_lea.sflag [#allocation7], 1
    %1294 = vsyncpa %s1293, 1
    %1295 = vsyncpa [#allocation10], 1
    %s1296 = scalar_lea.sflag [#allocation10], 1
    %1297 = vsyncpa %s1296, 1
    %1298 = vsyncpa [#allocation8], 1
    %s1299 = scalar_lea.sflag [#allocation8], 1
    %1300 = vsyncpa %s1299, 1

</llo_original>
